<compile_context>
chip_gen: v7x
topology: tpu7x:2x2x1
jax: 0.10.0
libtpu: 0.0.40
codegen_flags: <defaults>
</compile_context>

<pallas_src>
import jax
import jax.numpy as jnp
import numpy as np
from jax import lax
from jax.experimental import pallas as pl
from jax.experimental.pallas import tpu as pltpu


def make_flash_attention_kernel(heads: int, dim_head: int, tq: int,
                                approx_recip: bool):
    inner = heads * dim_head
    # contract the last dim of both operands (q_h . k_h along dim_head)
    CONTRACT_LAST = (((1,), (1,)), ((), ()))

    def kernel(q_ref, k_ref, v_ref, woT_ref, bo_ref, out_ref,
               m_scr, l_scr, acc_scr):
        # q_ref   : (1, tq, inner)   pre-projected, pre-scaled queries (cdt)
        # k_ref   : (1, tk, inner)   pre-projected keys   (cdt)
        # v_ref   : (1, tk, inner)   pre-projected values (cdt)
        # woT_ref : (inner, dq)      to_out weight, pre-transposed (cdt)
        # bo_ref  : (1, dq)          to_out bias (f32)
        # out_ref : (1, tq, dq)
        # m_scr   : (tq, heads) f32  online-softmax running max (lane-dense)
        # l_scr   : (tq, heads) f32  online-softmax running sum (lane-dense)
        # acc_scr : (tq, inner) f32  un-normalized output accumulator
        ki = pl.program_id(2)

        @pl.when(ki == 0)
        def _init():
            m_scr[...] = jnp.full_like(m_scr, -jnp.inf)
            l_scr[...] = jnp.zeros_like(l_scr)
            acc_scr[...] = jnp.zeros_like(acc_scr)

        q = q_ref[0]                                   # (tq, inner)
        k = k_ref[0]                                   # (tk, inner)
        v = v_ref[0]                                   # (tk, inner)
        m_prev = m_scr[...]                            # (tq, heads), one load
        l_prev = l_scr[...]                            # (tq, heads), one load

        m_cols, l_cols, alpha_blocks, pv_blocks = [], [], [], []
        # TODO(synk): mask (masked_fill -inf before softmax) not implemented.
        for h in range(heads):
            sl = slice(h * dim_head, (h + 1) * dim_head)
            # sim = q_h . k_h^T without materializing a key transpose.
            s = lax.dot_general(q[:, sl], k[:, sl], CONTRACT_LAST,
                                preferred_element_type=jnp.float32)  # (tq, tk)

            m_prev_h = m_prev[:, h:h + 1]                            # (tq, 1)
            m_new_h = jnp.maximum(m_prev_h, jnp.max(s, axis=-1, keepdims=True))
            alpha_h = jnp.exp(m_prev_h - m_new_h)                    # (tq, 1)
            p = jnp.exp(s - m_new_h)                                 # (tq, tk)
            l_new_h = (alpha_h * l_prev[:, h:h + 1]
                       + jnp.sum(p, axis=-1, keepdims=True))
            pv_h = jnp.dot(p.astype(v.dtype), v[:, sl],
                           preferred_element_type=jnp.float32)       # (tq, d)

            m_cols.append(m_new_h)
            l_cols.append(l_new_h)
            alpha_blocks.append(jnp.broadcast_to(alpha_h, (tq, dim_head)))
            pv_blocks.append(pv_h)

        # Lane-dense writes: one full-width store per array per KV step
        # (no per-head dim_head-wide masked read-modify-writes).
        m_scr[...] = jnp.concatenate(m_cols, axis=-1)                # (tq, heads)
        l_scr[...] = jnp.concatenate(l_cols, axis=-1)                # (tq, heads)
        alpha_full = jnp.concatenate(alpha_blocks, axis=-1)          # (tq, inner)
        pv_full = jnp.concatenate(pv_blocks, axis=-1)                # (tq, inner)
        acc_scr[...] = alpha_full * acc_scr[...] + pv_full

        @pl.when(ki == pl.num_programs(2) - 1)
        def _finalize():
            # one lane-dense reciprocal + one full-width normalize, then a
            # single inner-wide output projection on the MXU
            inv_l = pl.reciprocal(l_scr[...], approx=approx_recip)   # (tq, heads)
            inv_full = jnp.concatenate(
                [jnp.broadcast_to(inv_l[:, h:h + 1], (tq, dim_head))
                 for h in range(heads)], axis=-1)                    # (tq, inner)
            o = (acc_scr[...] * inv_full).astype(woT_ref.dtype)      # (tq, inner)
            out = jnp.dot(o, woT_ref[...],
                          preferred_element_type=jnp.float32)        # (tq, dq)
            out_ref[0] = (out + bo_ref[...]).astype(out_ref.dtype)

    return kernel


def attention_forward(x, wq, wkv, wo, bo, *, heads, dim_head, context=None,
                      q_tile=None, kv_tile=None, vmem_limit_bytes=None):
    """Pallas equivalent of Attention.forward(x, context=None, mask=None)."""
    if context is None:
        context = x
    b, n, dq = x.shape
    bc, m, dc = context.shape
    inner = heads * dim_head
    scale = dim_head ** (-0.5)
    assert bc == b
    assert wq.shape == (inner, dq)
    assert wkv.shape == (2 * inner, dc)
    assert wo.shape == (dq, inner)
    assert bo.shape == (dq,)

    # Compute dtype fed to the MXU (pass bf16 x/context on v6e/v7x).
    cdt = x.dtype

    # ---- One-time projections, hoisted out of the grid (done once in XLA as
    # large MXU-friendly matmuls instead of once per (query-tile, kv-tile)). ----
    q = jnp.einsum("bnd,ed->bne", x, wq * scale).astype(cdt)   # (b, n, inner), scaled
    kv = jnp.einsum("bmd,ed->bme", context, wkv)               # (b, m, 2*inner)
    k = kv[..., :inner].astype(cdt)                            # (b, m, inner)
    v = kv[..., inner:].astype(cdt)                            # (b, m, inner)
    woT = wo.T.astype(cdt)                                     # (inner, dq)
    bo2 = bo.reshape(1, dq).astype(jnp.float32)

    # Tile sizes (second-minor dims must be multiples of 8 or full extent).
    # v6e: tq=256/tk=512 recommended; v5e: tq=128/tk=256; v7x: budget vs 64 MiB.
    tq = q_tile if q_tile is not None else min(n, 256)
    tk = kv_tile if kv_tile is not None else min(m, 512)
    assert n % tq == 0 and m % tk == 0
    assert (tq % 8 == 0) or (tq == n)
    assert (tk % 8 == 0) or (tk == m)

    grid = (b, n // tq, m // tk)
    approx_recip = (cdt == jnp.bfloat16)
    kernel = make_flash_attention_kernel(heads, dim_head, tq, approx_recip)

    # Advisory cost hint so XLA can overlap the projection matmuls above.
    itemsize = jnp.dtype(cdt).itemsize
    flops = int(b * (4 * n * m * inner + 2 * n * inner * dq))
    transcendentals = int(b * heads * n * m)
    bytes_accessed = int((b * n * inner + 2 * b * m * inner + inner * dq) * itemsize
                         + b * n * dq * jnp.dtype(x.dtype).itemsize)
    cost = pl.CostEstimate(flops=flops, transcendentals=transcendentals,
                           bytes_accessed=bytes_accessed)

    cp_kwargs = dict(dimension_semantics=("parallel", "parallel", "arbitrary"))
    if vmem_limit_bytes is not None:
        cp_kwargs["vmem_limit_bytes"] = vmem_limit_bytes

    return pl.pallas_call(
        kernel,
        out_shape=jax.ShapeDtypeStruct((b, n, dq), x.dtype),
        grid_spec=pltpu.PrefetchScalarGridSpec(
            num_scalar_prefetch=0,
            grid=grid,
            in_specs=[
                pl.BlockSpec((1, tq, inner), lambda bi, qi, ki: (bi, qi, 0)),  # q
                pl.BlockSpec((1, tk, inner), lambda bi, qi, ki: (bi, ki, 0)),  # k
                pl.BlockSpec((1, tk, inner), lambda bi, qi, ki: (bi, ki, 0)),  # v
                pl.BlockSpec((inner, dq), lambda bi, qi, ki: (0, 0)),          # WoT
                pl.BlockSpec((1, dq), lambda bi, qi, ki: (0, 0)),              # bo
            ],
            out_specs=pl.BlockSpec((1, tq, dq), lambda bi, qi, ki: (bi, qi, 0)),
            scratch_shapes=[
                pltpu.VMEM((tq, heads), jnp.float32),   # m_scr (lane-dense stats)
                pltpu.VMEM((tq, heads), jnp.float32),   # l_scr
                pltpu.VMEM((tq, inner), jnp.float32),   # acc_scr
            ],
        ),
        compiler_params=pltpu.CompilerParams(**cp_kwargs),
        cost_estimate=cost,
    )(q, k, v, woT, bo2)


def attention_reference(x, wq, wkv, wo, bo, *, heads, dim_head, context=None):
    """Pure-JAX reference mirroring the PyTorch forward (f32 math)."""
    if context is None:
        context = x
    b, n, dq = x.shape
    inner = heads * dim_head
    scale = dim_head ** (-0.5)
    q = x @ wq.T                       # (b, n, inner)
    kv = context @ wkv.T               # (b, m, 2*inner)
    k, v = kv[..., :inner], kv[..., inner:]

    def split_heads(t):                # b n (h d) -> (b h) n d
        bb, nn, _ = t.shape
        return t.reshape(bb, nn, heads, dim_head).transpose(0, 2, 1, 3).reshape(
            bb * heads, nn, dim_head)

    qh, kh, vh = map(split_heads, (q, k, v))
    sim = jnp.einsum("bid,bjd->bij", qh, kh) * scale
    attn = jax.nn.softmax(sim, axis=-1)
    out = jnp.einsum("bij,bjd->bid", attn, vh)
    out = out.reshape(b, heads, n, dim_head).transpose(0, 2, 1, 3).reshape(b, n, inner)
    return out @ wo.T + bo


if __name__ == "__main__":
    # Small, module-consistent shapes (cross-attention: context_dim != query_dim).
    batch, n, query_dim = 2, 16, 32
    m, context_dim = 16, 64
    heads, dim_head = 4, 8
    inner = heads * dim_head

    key = jax.random.PRNGKey(0)
    kx, kc, kq, kkv, kwo, kbo, kkvs = jax.random.split(key, 7)

    x = jax.random.normal(kx, (batch, n, query_dim), dtype=jnp.float32)
    ctx = jax.random.normal(kc, (batch, m, context_dim), dtype=jnp.float32)

    # Deterministic parameter init (nn.Linear-style uniform bounds).
    def lin_init(k, out_f, in_f):
        bound = 1.0 / np.sqrt(in_f)
        return jax.random.uniform(k, (out_f, in_f), jnp.float32, -bound, bound)

    wq = lin_init(kq, inner, query_dim)            # to_q.weight   (no bias)
    wkv = lin_init(kkv, 2 * inner, context_dim)    # to_kv.weight  (no bias)
    wo = lin_init(kwo, query_dim, inner)           # to_out.weight
    bo = jax.random.uniform(kbo, (query_dim,), jnp.float32,
                            -1.0 / np.sqrt(inner), 1.0 / np.sqrt(inner))

    # --- f32 cross-attention, tiled: 2 query tiles x 2 KV tiles per batch ---
    out = attention_forward(x, wq, wkv, wo, bo, heads=heads, dim_head=dim_head,
                            context=ctx, q_tile=8, kv_tile=8)
    out = jax.block_until_ready(out)
    ref = attention_reference(x, wq, wkv, wo, bo, heads=heads, dim_head=dim_head,
                              context=ctx)
    assert out.shape == (batch, n, query_dim)
    np.testing.assert_allclose(np.asarray(out), np.asarray(ref),
                               atol=2e-3, rtol=2e-3)

    # --- f32 self-attention path (context=None), single KV tile ---
    wkv_s = lin_init(kkvs, 2 * inner, query_dim)
    out_s = attention_forward(x, wq, wkv_s, wo, bo, heads=heads, dim_head=dim_head)
    out_s = jax.block_until_ready(out_s)
    ref_s = attention_reference(x, wq, wkv_s, wo, bo, heads=heads, dim_head=dim_head)
    np.testing.assert_allclose(np.asarray(out_s), np.asarray(ref_s),
                               atol=2e-3, rtol=2e-3)

    # --- bf16 MXU path (v6e/v7x recommendation): loose tolerance vs f32 ref ---
    xb = x.astype(jnp.bfloat16)
    ctxb = ctx.astype(jnp.bfloat16)
    outb = attention_forward(xb, wq, wkv, wo, bo, heads=heads, dim_head=dim_head,
                             context=ctxb, q_tile=8, kv_tile=8)
    outb = jax.block_until_ready(outb)
    refb = attention_reference(xb.astype(jnp.float32), wq, wkv, wo, bo,
                               heads=heads, dim_head=dim_head,
                               context=ctxb.astype(jnp.float32))
    np.testing.assert_allclose(np.asarray(outb.astype(jnp.float32)),
                               np.asarray(refb), atol=5e-2, rtol=5e-2)

    print("KERNEL_OK")
</pallas_src>

<mosaic_0001>
module attributes {stable_mosaic.version = 11 : i64} {
  func.func @kernel(%arg0: i32, %arg1: i32, %arg2: i32, %arg3: memref<1x8x32xf32, #tpu.memory_space<vmem>>, %arg4: memref<1x8x32xf32, #tpu.memory_space<vmem>>, %arg5: memref<1x8x32xf32, #tpu.memory_space<vmem>>, %arg6: memref<32x32xf32, #tpu.memory_space<vmem>>, %arg7: memref<1x32xf32, #tpu.memory_space<vmem>>, %arg8: memref<1x8x32xf32, #tpu.memory_space<vmem>>, %arg9: memref<8x4xf32, #tpu.memory_space<vmem>>, %arg10: memref<8x4xf32, #tpu.memory_space<vmem>>, %arg11: memref<8x32xf32, #tpu.memory_space<vmem>>) attributes {dimension_semantics = [#tpu.dimension_semantics<parallel>, #tpu.dimension_semantics<parallel>, #tpu.dimension_semantics<arbitrary>], iteration_bounds = array<i64: 2, 2, 2>, scalar_prefetch = 0 : i64, scratch_operands = 3 : i64, tpu.core_type = #tpu.core_type<tc>, window_params = [{transform_indices = @transform_0, window_bounds = array<i64: 1, 8, 32>}, {transform_indices = @transform_1, window_bounds = array<i64: 1, 8, 32>}, {transform_indices = @transform_2, window_bounds = array<i64: 1, 8, 32>}, {pipeline_mode = #tpu.pipeline_mode<synchronous>, transform_indices = @transform_3, window_bounds = array<i64: 32, 32>}, {pipeline_mode = #tpu.pipeline_mode<synchronous>, transform_indices = @transform_4, window_bounds = array<i64: 1, 32>}, {transform_indices = @transform_5, window_bounds = array<i64: 1, 8, 32>}]} {
    %c0_i32 = arith.constant 0 : i32
    %0 = arith.cmpi eq, %arg2, %c0_i32 : i32
    %1 = arith.extui %0 : i1 to i32
    %c0_i32_0 = arith.constant 0 : i32
    %2 = arith.cmpi ne, %1, %c0_i32_0 : i32
    scf.if %2 {
      %cst_37 = arith.constant 0xFF800000 : f32
      %108 = vector.broadcast %cst_37 : f32 to vector<8x4xf32>
      %c0_38 = arith.constant 0 : index
      %c0_39 = arith.constant 0 : index
      %109 = vector.load %arg9[%c0_38, %c0_39] : memref<8x4xf32, #tpu.memory_space<vmem>>, vector<8x4xf32>
      tpu.vector_store %arg9[%c0_38, %c0_39], %108 {strides = array<i32>} : memref<8x4xf32, #tpu.memory_space<vmem>>, vector<8x4xf32>,
      %cst_40 = arith.constant 0.000000e+00 : f32
      %110 = vector.broadcast %cst_40 : f32 to vector<8x4xf32>
      %c0_41 = arith.constant 0 : index
      %c0_42 = arith.constant 0 : index
      %111 = vector.load %arg10[%c0_41, %c0_42] : memref<8x4xf32, #tpu.memory_space<vmem>>, vector<8x4xf32>
      tpu.vector_store %arg10[%c0_41, %c0_42], %110 {strides = array<i32>} : memref<8x4xf32, #tpu.memory_space<vmem>>, vector<8x4xf32>,
      %cst_43 = arith.constant 0.000000e+00 : f32
      %112 = vector.broadcast %cst_43 : f32 to vector<8x32xf32>
      %c0_44 = arith.constant 0 : index
      %c0_45 = arith.constant 0 : index
      %113 = vector.load %arg11[%c0_44, %c0_45] : memref<8x32xf32, #tpu.memory_space<vmem>>, vector<8x32xf32>
      tpu.vector_store %arg11[%c0_44, %c0_45], %112 {strides = array<i32>} : memref<8x32xf32, #tpu.memory_space<vmem>>, vector<8x32xf32>,
    } else {
    }
    %c0 = arith.constant 0 : index
    %c0_1 = arith.constant 0 : index
    %c0_2 = arith.constant 0 : index
    %3 = vector.load %arg3[%c0, %c0_1, %c0_2] : memref<1x8x32xf32, #tpu.memory_space<vmem>>, vector<1x8x32xf32>
    %4 = vector.shape_cast %3 : vector<1x8x32xf32> to vector<8x32xf32>
    %c0_3 = arith.constant 0 : index
    %c0_4 = arith.constant 0 : index
    %c0_5 = arith.constant 0 : index
    %5 = vector.load %arg4[%c0_3, %c0_4, %c0_5] : memref<1x8x32xf32, #tpu.memory_space<vmem>>, vector<1x8x32xf32>
    %6 = vector.shape_cast %5 : vector<1x8x32xf32> to vector<8x32xf32>
    %c0_6 = arith.constant 0 : index
    %c0_7 = arith.constant 0 : index
    %c0_8 = arith.constant 0 : index
    %7 = vector.load %arg5[%c0_6, %c0_7, %c0_8] : memref<1x8x32xf32, #tpu.memory_space<vmem>>, vector<1x8x32xf32>
    %8 = vector.shape_cast %7 : vector<1x8x32xf32> to vector<8x32xf32>
    %c0_9 = arith.constant 0 : index
    %c0_10 = arith.constant 0 : index
    %9 = vector.load %arg9[%c0_9, %c0_10] : memref<8x4xf32, #tpu.memory_space<vmem>>, vector<8x4xf32>
    %c0_11 = arith.constant 0 : index
    %c0_12 = arith.constant 0 : index
    %10 = vector.load %arg10[%c0_11, %c0_12] : memref<8x4xf32, #tpu.memory_space<vmem>>, vector<8x4xf32>
    %11 = vector.extract_strided_slice %4 {offsets = [0, 0], sizes = [8, 8], strides = [1, 1]} : vector<8x32xf32> to vector<8x8xf32>
    %12 = vector.extract_strided_slice %6 {offsets = [0, 0], sizes = [8, 8], strides = [1, 1]} : vector<8x32xf32> to vector<8x8xf32>
    %cst = arith.constant dense<0.000000e+00> : vector<8x8xf32>
    %13 = tpu.matmul %11, %12, %cst {dimension_numbers = #tpu.dot_dimension_numbers<[1], [1], [0], [0], [0, 0, 1, 0], [], []>} : vector<8x8xf32>, vector<8x8xf32>, vector<8x8xf32> -> vector<8x8xf32>
    %14 = vector.extract_strided_slice %9 {offsets = [0, 0], sizes = [8, 1], strides = [1, 1]} : vector<8x4xf32> to vector<8x1xf32>
    %cst_13 = arith.constant dense<0xFF800000> : vector<8xf32>
    %15 = vector.multi_reduction <maximumf>, %13, %cst_13 [1] : vector<8x8xf32> to vector<8xf32>
    %16 = vector.shape_cast %15 : vector<8xf32> to vector<8x1xf32>
    %17 = arith.maximumf %14, %16 : vector<8x1xf32>
    %18 = arith.subf %14, %17 : vector<8x1xf32>
    %19 = math.exp %18 : vector<8x1xf32>
    %20 = vector.broadcast %17 : vector<8x1xf32> to vector<8x8xf32>
    %21 = arith.subf %13, %20 : vector<8x8xf32>
    %22 = math.exp %21 : vector<8x8xf32>
    %23 = vector.extract_strided_slice %10 {offsets = [0, 0], sizes = [8, 1], strides = [1, 1]} : vector<8x4xf32> to vector<8x1xf32>
    %24 = arith.mulf %19, %23 : vector<8x1xf32>
    %cst_14 = arith.constant dense<0.000000e+00> : vector<8xf32>
    %25 = vector.multi_reduction <add>, %22, %cst_14 [1] : vector<8x8xf32> to vector<8xf32>
    %26 = vector.shape_cast %25 : vector<8xf32> to vector<8x1xf32>
    %27 = arith.addf %24, %26 : vector<8x1xf32>
    %28 = vector.extract_strided_slice %8 {offsets = [0, 0], sizes = [8, 8], strides = [1, 1]} : vector<8x32xf32> to vector<8x8xf32>
    %cst_15 = arith.constant dense<0.000000e+00> : vector<8x8xf32>
    %29 = tpu.matmul %22, %28, %cst_15 {dimension_numbers = #tpu.dot_dimension_numbers<[1], [0], [0], [1], [0, 0, 1, 1], [], []>} : vector<8x8xf32>, vector<8x8xf32>, vector<8x8xf32> -> vector<8x8xf32>
    %30 = vector.shape_cast %19 : vector<8x1xf32> to vector<8x1xf32>
    %31 = vector.broadcast %30 : vector<8x1xf32> to vector<8x8xf32>
    %32 = vector.extract_strided_slice %4 {offsets = [0, 8], sizes = [8, 8], strides = [1, 1]} : vector<8x32xf32> to vector<8x8xf32>
    %33 = vector.extract_strided_slice %6 {offsets = [0, 8], sizes = [8, 8], strides = [1, 1]} : vector<8x32xf32> to vector<8x8xf32>
    %cst_16 = arith.constant dense<0.000000e+00> : vector<8x8xf32>
    %34 = tpu.matmul %32, %33, %cst_16 {dimension_numbers = #tpu.dot_dimension_numbers<[1], [1], [0], [0], [0, 0, 1, 0], [], []>} : vector<8x8xf32>, vector<8x8xf32>, vector<8x8xf32> -> vector<8x8xf32>
    %35 = vector.extract_strided_slice %9 {offsets = [0, 1], sizes = [8, 1], strides = [1, 1]} : vector<8x4xf32> to vector<8x1xf32>
    %cst_17 = arith.constant dense<0xFF800000> : vector<8xf32>
    %36 = vector.multi_reduction <maximumf>, %34, %cst_17 [1] : vector<8x8xf32> to vector<8xf32>
    %37 = vector.shape_cast %36 : vector<8xf32> to vector<8x1xf32>
    %38 = arith.maximumf %35, %37 : vector<8x1xf32>
    %39 = arith.subf %35, %38 : vector<8x1xf32>
    %40 = math.exp %39 : vector<8x1xf32>
    %41 = vector.broadcast %38 : vector<8x1xf32> to vector<8x8xf32>
    %42 = arith.subf %34, %41 : vector<8x8xf32>
    %43 = math.exp %42 : vector<8x8xf32>
    %44 = vector.extract_strided_slice %10 {offsets = [0, 1], sizes = [8, 1], strides = [1, 1]} : vector<8x4xf32> to vector<8x1xf32>
    %45 = arith.mulf %40, %44 : vector<8x1xf32>
    %cst_18 = arith.constant dense<0.000000e+00> : vector<8xf32>
    %46 = vector.multi_reduction <add>, %43, %cst_18 [1] : vector<8x8xf32> to vector<8xf32>
    %47 = vector.shape_cast %46 : vector<8xf32> to vector<8x1xf32>
    %48 = arith.addf %45, %47 : vector<8x1xf32>
    %49 = vector.extract_strided_slice %8 {offsets = [0, 8], sizes = [8, 8], strides = [1, 1]} : vector<8x32xf32> to vector<8x8xf32>
    %cst_19 = arith.constant dense<0.000000e+00> : vector<8x8xf32>
    %50 = tpu.matmul %43, %49, %cst_19 {dimension_numbers = #tpu.dot_dimension_numbers<[1], [0], [0], [1], [0, 0, 1, 1], [], []>} : vector<8x8xf32>, vector<8x8xf32>, vector<8x8xf32> -> vector<8x8xf32>
    %51 = vector.shape_cast %40 : vector<8x1xf32> to vector<8x1xf32>
    %52 = vector.broadcast %51 : vector<8x1xf32> to vector<8x8xf32>
    %53 = vector.extract_strided_slice %4 {offsets = [0, 16], sizes = [8, 8], strides = [1, 1]} : vector<8x32xf32> to vector<8x8xf32>
    %54 = vector.extract_strided_slice %6 {offsets = [0, 16], sizes = [8, 8], strides = [1, 1]} : vector<8x32xf32> to vector<8x8xf32>
    %cst_20 = arith.constant dense<0.000000e+00> : vector<8x8xf32>
    %55 = tpu.matmul %53, %54, %cst_20 {dimension_numbers = #tpu.dot_dimension_numbers<[1], [1], [0], [0], [0, 0, 1, 0], [], []>} : vector<8x8xf32>, vector<8x8xf32>, vector<8x8xf32> -> vector<8x8xf32>
    %56 = vector.extract_strided_slice %9 {offsets = [0, 2], sizes = [8, 1], strides = [1, 1]} : vector<8x4xf32> to vector<8x1xf32>
    %cst_21 = arith.constant dense<0xFF800000> : vector<8xf32>
    %57 = vector.multi_reduction <maximumf>, %55, %cst_21 [1] : vector<8x8xf32> to vector<8xf32>
    %58 = vector.shape_cast %57 : vector<8xf32> to vector<8x1xf32>
    %59 = arith.maximumf %56, %58 : vector<8x1xf32>
    %60 = arith.subf %56, %59 : vector<8x1xf32>
    %61 = math.exp %60 : vector<8x1xf32>
    %62 = vector.broadcast %59 : vector<8x1xf32> to vector<8x8xf32>
    %63 = arith.subf %55, %62 : vector<8x8xf32>
    %64 = math.exp %63 : vector<8x8xf32>
    %65 = vector.extract_strided_slice %10 {offsets = [0, 2], sizes = [8, 1], strides = [1, 1]} : vector<8x4xf32> to vector<8x1xf32>
    %66 = arith.mulf %61, %65 : vector<8x1xf32>
    %cst_22 = arith.constant dense<0.000000e+00> : vector<8xf32>
    %67 = vector.multi_reduction <add>, %64, %cst_22 [1] : vector<8x8xf32> to vector<8xf32>
    %68 = vector.shape_cast %67 : vector<8xf32> to vector<8x1xf32>
    %69 = arith.addf %66, %68 : vector<8x1xf32>
    %70 = vector.extract_strided_slice %8 {offsets = [0, 16], sizes = [8, 8], strides = [1, 1]} : vector<8x32xf32> to vector<8x8xf32>
    %cst_23 = arith.constant dense<0.000000e+00> : vector<8x8xf32>
    %71 = tpu.matmul %64, %70, %cst_23 {dimension_numbers = #tpu.dot_dimension_numbers<[1], [0], [0], [1], [0, 0, 1, 1], [], []>} : vector<8x8xf32>, vector<8x8xf32>, vector<8x8xf32> -> vector<8x8xf32>
    %72 = vector.shape_cast %61 : vector<8x1xf32> to vector<8x1xf32>
    %73 = vector.broadcast %72 : vector<8x1xf32> to vector<8x8xf32>
    %74 = vector.extract_strided_slice %4 {offsets = [0, 24], sizes = [8, 8], strides = [1, 1]} : vector<8x32xf32> to vector<8x8xf32>
    %75 = vector.extract_strided_slice %6 {offsets = [0, 24], sizes = [8, 8], strides = [1, 1]} : vector<8x32xf32> to vector<8x8xf32>
    %cst_24 = arith.constant dense<0.000000e+00> : vector<8x8xf32>
    %76 = tpu.matmul %74, %75, %cst_24 {dimension_numbers = #tpu.dot_dimension_numbers<[1], [1], [0], [0], [0, 0, 1, 0], [], []>} : vector<8x8xf32>, vector<8x8xf32>, vector<8x8xf32> -> vector<8x8xf32>
    %77 = vector.extract_strided_slice %9 {offsets = [0, 3], sizes = [8, 1], strides = [1, 1]} : vector<8x4xf32> to vector<8x1xf32>
    %cst_25 = arith.constant dense<0xFF800000> : vector<8xf32>
    %78 = vector.multi_reduction <maximumf>, %76, %cst_25 [1] : vector<8x8xf32> to vector<8xf32>
    %79 = vector.shape_cast %78 : vector<8xf32> to vector<8x1xf32>
    %80 = arith.maximumf %77, %79 : vector<8x1xf32>
    %81 = arith.subf %77, %80 : vector<8x1xf32>
    %82 = math.exp %81 : vector<8x1xf32>
    %83 = vector.broadcast %80 : vector<8x1xf32> to vector<8x8xf32>
    %84 = arith.subf %76, %83 : vector<8x8xf32>
    %85 = math.exp %84 : vector<8x8xf32>
    %86 = vector.extract_strided_slice %10 {offsets = [0, 3], sizes = [8, 1], strides = [1, 1]} : vector<8x4xf32> to vector<8x1xf32>
    %87 = arith.mulf %82, %86 : vector<8x1xf32>
    %cst_26 = arith.constant dense<0.000000e+00> : vector<8xf32>
    %88 = vector.multi_reduction <add>, %85, %cst_26 [1] : vector<8x8xf32> to vector<8xf32>
    %89 = vector.shape_cast %88 : vector<8xf32> to vector<8x1xf32>
    %90 = arith.addf %87, %89 : vector<8x1xf32>
    %91 = vector.extract_strided_slice %8 {offsets = [0, 24], sizes = [8, 8], strides = [1, 1]} : vector<8x32xf32> to vector<8x8xf32>
    %cst_27 = arith.constant dense<0.000000e+00> : vector<8x8xf32>
    %92 = tpu.matmul %85, %91, %cst_27 {dimension_numbers = #tpu.dot_dimension_numbers<[1], [0], [0], [1], [0, 0, 1, 1], [], []>} : vector<8x8xf32>, vector<8x8xf32>, vector<8x8xf32> -> vector<8x8xf32>
    %93 = vector.shape_cast %82 : vector<8x1xf32> to vector<8x1xf32>
    %94 = vector.broadcast %93 : vector<8x1xf32> to vector<8x8xf32>
    %95 = tpu.concatenate %17, %38, %59, %80 in 1 : vector<8x1xf32>, vector<8x1xf32>, vector<8x1xf32>, vector<8x1xf32> -> vector<8x4xf32>
    %c0_28 = arith.constant 0 : index
    %c0_29 = arith.constant 0 : index
    %96 = vector.load %arg9[%c0_28, %c0_29] : memref<8x4xf32, #tpu.memory_space<vmem>>, vector<8x4xf32>
    tpu.vector_store %arg9[%c0_28, %c0_29], %95 {strides = array<i32>} : memref<8x4xf32, #tpu.memory_space<vmem>>, vector<8x4xf32>,
    %97 = tpu.concatenate %27, %48, %69, %90 in 1 : vector<8x1xf32>, vector<8x1xf32>, vector<8x1xf32>, vector<8x1xf32> -> vector<8x4xf32>
    %c0_30 = arith.constant 0 : index
    %c0_31 = arith.constant 0 : index
    %98 = vector.load %arg10[%c0_30, %c0_31] : memref<8x4xf32, #tpu.memory_space<vmem>>, vector<8x4xf32>
    tpu.vector_store %arg10[%c0_30, %c0_31], %97 {strides = array<i32>} : memref<8x4xf32, #tpu.memory_space<vmem>>, vector<8x4xf32>,
    %99 = tpu.concatenate %31, %52, %73, %94 in 1 : vector<8x8xf32>, vector<8x8xf32>, vector<8x8xf32>, vector<8x8xf32> -> vector<8x32xf32>
    %100 = tpu.concatenate %29, %50, %71, %92 in 1 : vector<8x8xf32>, vector<8x8xf32>, vector<8x8xf32>, vector<8x8xf32> -> vector<8x32xf32>
    %c0_32 = arith.constant 0 : index
    %c0_33 = arith.constant 0 : index
    %101 = vector.load %arg11[%c0_32, %c0_33] : memref<8x32xf32, #tpu.memory_space<vmem>>, vector<8x32xf32>
    %102 = arith.mulf %99, %101 : vector<8x32xf32>
    %103 = arith.addf %102, %100 : vector<8x32xf32>
    %c0_34 = arith.constant 0 : index
    %c0_35 = arith.constant 0 : index
    %104 = vector.load %arg11[%c0_34, %c0_35] : memref<8x32xf32, #tpu.memory_space<vmem>>, vector<8x32xf32>
    tpu.vector_store %arg11[%c0_34, %c0_35], %103 {strides = array<i32>} : memref<8x32xf32, #tpu.memory_space<vmem>>, vector<8x32xf32>,
    %c1_i32 = arith.constant 1 : i32
    %105 = arith.cmpi eq, %arg2, %c1_i32 : i32
    %106 = arith.extui %105 : i1 to i32
    %c0_i32_36 = arith.constant 0 : i32
    %107 = arith.cmpi ne, %106, %c0_i32_36 : i32
    scf.if %107 {
      %c0_37 = arith.constant 0 : index
      %c0_38 = arith.constant 0 : index
      %108 = vector.load %arg10[%c0_37, %c0_38] : memref<8x4xf32, #tpu.memory_space<vmem>>, vector<8x4xf32>
      %109 = tpu.reciprocal %108 : vector<8x4xf32> -> vector<8x4xf32>
      %110 = vector.extract_strided_slice %109 {offsets = [0, 0], sizes = [8, 1], strides = [1, 1]} : vector<8x4xf32> to vector<8x1xf32>
      %111 = vector.shape_cast %110 : vector<8x1xf32> to vector<8x1xf32>
      %112 = vector.broadcast %111 : vector<8x1xf32> to vector<8x8xf32>
      %113 = vector.extract_strided_slice %109 {offsets = [0, 1], sizes = [8, 1], strides = [1, 1]} : vector<8x4xf32> to vector<8x1xf32>
      %114 = vector.shape_cast %113 : vector<8x1xf32> to vector<8x1xf32>
      %115 = vector.broadcast %114 : vector<8x1xf32> to vector<8x8xf32>
      %116 = vector.extract_strided_slice %109 {offsets = [0, 2], sizes = [8, 1], strides = [1, 1]} : vector<8x4xf32> to vector<8x1xf32>
      %117 = vector.shape_cast %116 : vector<8x1xf32> to vector<8x1xf32>
      %118 = vector.broadcast %117 : vector<8x1xf32> to vector<8x8xf32>
      %119 = vector.extract_strided_slice %109 {offsets = [0, 3], sizes = [8, 1], strides = [1, 1]} : vector<8x4xf32> to vector<8x1xf32>
      %120 = vector.shape_cast %119 : vector<8x1xf32> to vector<8x1xf32>
      %121 = vector.broadcast %120 : vector<8x1xf32> to vector<8x8xf32>
      %122 = tpu.concatenate %112, %115, %118, %121 in 1 : vector<8x8xf32>, vector<8x8xf32>, vector<8x8xf32>, vector<8x8xf32> -> vector<8x32xf32>
      %c0_39 = arith.constant 0 : index
      %c0_40 = arith.constant 0 : index
      %123 = vector.load %arg11[%c0_39, %c0_40] : memref<8x32xf32, #tpu.memory_space<vmem>>, vector<8x32xf32>
      %124 = arith.mulf %123, %122 : vector<8x32xf32>
      %c0_41 = arith.constant 0 : index
      %c0_42 = arith.constant 0 : index
      %125 = vector.load %arg6[%c0_41, %c0_42] : memref<32x32xf32, #tpu.memory_space<vmem>>, vector<32x32xf32>
      %cst_43 = arith.constant dense<0.000000e+00> : vector<8x32xf32>
      %126 = tpu.matmul %124, %125, %cst_43 {dimension_numbers = #tpu.dot_dimension_numbers<[1], [0], [0], [1], [0, 0, 1, 1], [], []>} : vector<8x32xf32>, vector<32x32xf32>, vector<8x32xf32> -> vector<8x32xf32>
      %c0_44 = arith.constant 0 : index
      %c0_45 = arith.constant 0 : index
      %127 = vector.load %arg7[%c0_44, %c0_45] : memref<1x32xf32, #tpu.memory_space<vmem>>, vector<1x32xf32>
      %128 = vector.broadcast %127 : vector<1x32xf32> to vector<8x32xf32>
      %129 = arith.addf %126, %128 : vector<8x32xf32>
      %c0_46 = arith.constant 0 : index
      %c0_47 = arith.constant 0 : index
      %c0_48 = arith.constant 0 : index
      %130 = vector.load %arg8[%c0_46, %c0_47, %c0_48] : memref<1x8x32xf32, #tpu.memory_space<vmem>>, vector<1x8x32xf32>
      %131 = vector.shape_cast %130 : vector<1x8x32xf32> to vector<8x32xf32>
      %132 = vector.shape_cast %129 : vector<8x32xf32> to vector<1x8x32xf32>
      tpu.vector_store %arg8[%c0_46, %c0_47, %c0_48], %132 {strides = array<i32>} : memref<1x8x32xf32, #tpu.memory_space<vmem>>, vector<1x8x32xf32>,
    } else {
    }
    return
  }
  func.func @transform_0(%arg0: i32, %arg1: i32, %arg2: i32) -> (i32, i32, i32) {
    %c0_i32 = arith.constant 0 : i32
    %c0_i32_0 = arith.constant 0 : i32
    return %arg0, %arg1, %c0_i32 : i32, i32, i32
  }
  func.func @transform_1(%arg0: i32, %arg1: i32, %arg2: i32) -> (i32, i32, i32) {
    %c0_i32 = arith.constant 0 : i32
    %c0_i32_0 = arith.constant 0 : i32
    return %arg0, %arg2, %c0_i32 : i32, i32, i32
  }
  func.func @transform_2(%arg0: i32, %arg1: i32, %arg2: i32) -> (i32, i32, i32) {
    %c0_i32 = arith.constant 0 : i32
    %c0_i32_0 = arith.constant 0 : i32
    return %arg0, %arg2, %c0_i32 : i32, i32, i32
  }
  func.func @transform_3(%arg0: i32, %arg1: i32, %arg2: i32) -> (i32, i32) {
    %c0_i32 = arith.constant 0 : i32
    %c0_i32_0 = arith.constant 0 : i32
    %c0_i32_1 = arith.constant 0 : i32
    return %c0_i32, %c0_i32_0 : i32, i32
  }
  func.func @transform_4(%arg0: i32, %arg1: i32, %arg2: i32) -> (i32, i32) {
    %c0_i32 = arith.constant 0 : i32
    %c0_i32_0 = arith.constant 0 : i32
    %c0_i32_1 = arith.constant 0 : i32
    return %c0_i32, %c0_i32_0 : i32, i32
  }
  func.func @transform_5(%arg0: i32, %arg1: i32, %arg2: i32) -> (i32, i32, i32) {
    %c0_i32 = arith.constant 0 : i32
    %c0_i32_0 = arith.constant 0 : i32
    return %arg0, %arg1, %c0_i32 : i32, i32, i32
  }
}

</mosaic_0001>

<llo_original>
// kernel: tpu_custom_call.1
$region0: #{tpu_custom_call.1}
  #allocation0 [shape = 'u32[]', space=smem, size = 0x4, offset = 0x4, fixed_abs, tag = 'smem constant byte address 0x4 - core index']
  #allocation1 [shape = 'u32[144,128]{1,0:T(1,128)}', space=vmem, size = 0x12000, scoped, tag = 'internal scratch']
  #allocation2 [shape = 'f32[8,4]{1,0:T(8,128)}', space=vmem, size = 0x1000, scoped, tag = 'scratch operand']
  #allocation3 [shape = 'f32[8,4]{1,0:T(8,128)}', space=vmem, size = 0x1000, scoped, tag = 'scratch operand']
  #allocation4 [shape = 'f32[8,32]{1,0:T(8,128)}', space=vmem, size = 0x1000, scoped, tag = 'scratch operand']
  %s0 = inlined_call_operand.hbm [shape: f32[2,16,32], index: 0, kind: input, shape index: {}]
  %s1 = inlined_call_operand.hbm [shape: f32[2,16,32], index: 1, kind: input, shape index: {}]
  %s2 = inlined_call_operand.hbm [shape: f32[2,16,32], index: 2, kind: input, shape index: {}]
  %s3 = inlined_call_operand.hbm [shape: f32[32,32], index: 3, kind: input, shape index: {}]
  %s4 = inlined_call_operand.vmem [shape: f32[1,32], index: 4, kind: input, shape index: {}]
  %s5 = inlined_call_operand.hbm [shape: f32[2,16,32], index: 5, kind: output, shape index: {}]
  %s6 = sld [smem:[#allocation0]]
  $region77: #{tpu_custom_call.1} parent=0
    _
  %s8 = ssub.s32 1, %s6
  %s9 = scalar_select 0, %s8, %s6
  $region1: #{tpu_custom_call.1} parent=0
    #allocation5 [shape = 'u8[8192]{0}', space=vmem, size = 0x2000, scoped, tag = 'input window, operand 0']
    #allocation6 [shape = 's32[2]{0}', space=sflag, size = 0x8, scoped, tag = 'scoped memory for tpu_custom_call.1']
    #allocation7 [shape = 's32[2]{0}', space=sflag, size = 0x8, scoped, tag = 'scoped memory for tpu_custom_call.1']
    #allocation8 [shape = 'u8[8192]{0}', space=vmem, size = 0x2000, scoped, tag = 'input window, operand 1']
    #allocation9 [shape = 's32[2]{0}', space=sflag, size = 0x8, scoped, tag = 'scoped memory for tpu_custom_call.1']
    #allocation10 [shape = 'u8[8192]{0}', space=vmem, size = 0x2000, scoped, tag = 'input window, operand 2']
    #allocation11 [shape = 'u8[16384]{0}', space=vmem, size = 0x4000, scoped, tag = 'input window, operand 3, single buffered']
    #allocation12 [shape = 's32[1]{0}', space=sflag, size = 0x4, scoped, tag = 'scoped memory for tpu_custom_call.1']
    #allocation13 [shape = 'u8[8192]{0}', space=vmem, size = 0x2000, scoped, tag = 'output window, operand 0']
    %10 = vsyncpa [#allocation6], 0
    %s11 = scalar_lea.sflag [#allocation6], 1
    %12 = vsyncpa %s11, 0
    %13 = vsyncpa [#allocation9], 0
    %s14 = scalar_lea.sflag [#allocation9], 1
    %15 = vsyncpa %s14, 0
    %16 = vsyncpa [#allocation12], 0
    %17 = vsyncpa [#allocation7], 0
    %s18 = scalar_lea.sflag [#allocation7], 1
    %19 = vsyncpa %s18, 0
    loop: start=0, step=1, limit=10
    $region2: #{tpu_custom_call.1} parent=1 // loop_pre_header
      _
    $region3: #{tpu_custom_call.1} parent=1 // loop_header
      %s21 = sphi 0, %s25
      %p22 = scmp.ge.s32.totalorder %s21, 10
      %s28 = sphi 0, %s47
      %s29 = sphi 0, %s43
      %s30 = sphi 0, %s39
      %s31 = sphi 0, %s28
      %s32 = sphi 0, %s29
      %s33 = sphi 0, %s30
      %s34 = sphi 0, %s31
      %s35 = sphi 0, %s32
      %s36 = sphi 0, %s33
      %s52 = sphi 0, %s54
      %s55 = sphi 0, %s52
      %s56 = sphi 0, %s55
      %s72 = sphi 0, %s56
      %s80 = sphi 0, %s82
      %s83 = sphi 0, %s80
      %s84 = sphi 0, %s83
      %s100 = sphi 0, %s84
      %s108 = sphi 0, %s110
      %s111 = sphi 0, %s108
      %s112 = sphi 0, %s111
      %s128 = sphi 0, %s112
      %s132 = sphi 0, %s132
      %s134 = sphi 0, %s132
      %s135 = sphi 0, %s134
      %s149 = sphi 0, %s135
      %s153 = sphi 0, %s153
      %s155 = sphi 0, %s153
      %s156 = sphi 0, %s155
      %s170 = sphi 0, %s156
      %s178 = sphi 0, %s180
      %s181 = sphi 0, %s178
      %s182 = sphi 0, %s181
      %s198 = sphi 0, %s182
    $region4: #{tpu_custom_call.1} parent=1 // loop_header_branch
      %24 = sbr.rel (%p22) target = $region8
    $region5: #{tpu_custom_call.1} parent=1 // loop_body
      %s26 = ssub.s32 %s21, 1
      %s27 = ssub.s32 %s21, 2
      %s37 = sadd.s32 1, %s30
      %p38 = scmp.ge.s32.totalorder %s37, 2
      %s39 = scalar_select %p38, 0, %s37
      %s40 = sadd.s32 1, %s29
      %s41 = scalar_select %p38, %s40, %s29
      %p42 = scmp.ge.s32.totalorder %s41, 2
      %s43 = scalar_select %p42, 0, %s41
      %s44 = sadd.s32 1, %s28
      %s45 = scalar_select %p42, %s44, %s28
      %p46 = scmp.ge.s32.totalorder %s45, 2
      %s47 = scalar_select %p46, 0, %s45
      %s48 = ssub.s32 %s28, %s47
      %s49 = ssub.s32 %s29, %s43
      %s50 = sor.u32 %s48, %s49
      %p51 = scmp.eq.s32.totalorder %s50, 0
      %s53 = sadd.s32 %s52, 1
      %s54 = scalar_select %p51, %s52, %s53
      %p57 = pneg %p51
      %p58 = scmp.eq.s32.totalorder %s21, 7
      %p59 = por %p57, %p58
      %p60 = scmp.ne.s32.totalorder %s52, %s55
      %p61 = scmp.eq.s32.totalorder %s21, 0
      %p62 = por %p60, %p61
      %p63 = scmp.ne.s32.totalorder %s52, %s55
      %p64 = scmp.eq.s32.totalorder %s26, 7
      %p65 = por %p63, %p64
      %p66 = scmp.ne.s32.totalorder %s55, %s56
      %p67 = scmp.eq.s32.totalorder %s26, 0
      %p68 = por %p66, %p67
      %p69 = scmp.ne.s32.totalorder %s55, %s56
      %p70 = scmp.eq.s32.totalorder %s27, 7
      %p71 = por %p69, %p70
      %p73 = scmp.ne.s32.totalorder %s56, %s72
      %p74 = scmp.eq.s32.totalorder %s27, 0
      %p75 = por %p73, %p74
      %s76 = ssub.s32 %s28, %s47
      %s77 = ssub.s32 %s30, %s39
      %s78 = sor.u32 %s76, %s77
      %p79 = scmp.eq.s32.totalorder %s78, 0
      %s81 = sadd.s32 %s80, 1
      %s82 = scalar_select %p79, %s80, %s81
      %p85 = pneg %p79
      %p86 = scmp.eq.s32.totalorder %s21, 7
      %p87 = por %p85, %p86
      %p88 = scmp.ne.s32.totalorder %s80, %s83
      %p89 = scmp.eq.s32.totalorder %s21, 0
      %p90 = por %p88, %p89
      %p91 = scmp.ne.s32.totalorder %s80, %s83
      %p92 = scmp.eq.s32.totalorder %s26, 7
      %p93 = por %p91, %p92
      %p94 = scmp.ne.s32.totalorder %s83, %s84
      %p95 = scmp.eq.s32.totalorder %s26, 0
      %p96 = por %p94, %p95
      %p97 = scmp.ne.s32.totalorder %s83, %s84
      %p98 = scmp.eq.s32.totalorder %s27, 7
      %p99 = por %p97, %p98
      %p101 = scmp.ne.s32.totalorder %s84, %s100
      %p102 = scmp.eq.s32.totalorder %s27, 0
      %p103 = por %p101, %p102
      %s104 = ssub.s32 %s28, %s47
      %s105 = ssub.s32 %s30, %s39
      %s106 = sor.u32 %s104, %s105
      %p107 = scmp.eq.s32.totalorder %s106, 0
      %s109 = sadd.s32 %s108, 1
      %s110 = scalar_select %p107, %s108, %s109
      %p113 = pneg %p107
      %p114 = scmp.eq.s32.totalorder %s21, 7
      %p115 = por %p113, %p114
      %p116 = scmp.ne.s32.totalorder %s108, %s111
      %p117 = scmp.eq.s32.totalorder %s21, 0
      %p118 = por %p116, %p117
      %p119 = scmp.ne.s32.totalorder %s108, %s111
      %p120 = scmp.eq.s32.totalorder %s26, 7
      %p121 = por %p119, %p120
      %p122 = scmp.ne.s32.totalorder %s111, %s112
      %p123 = scmp.eq.s32.totalorder %s26, 0
      %p124 = por %p122, %p123
      %p125 = scmp.ne.s32.totalorder %s111, %s112
      %p126 = scmp.eq.s32.totalorder %s27, 7
      %p127 = por %p125, %p126
      %p129 = scmp.ne.s32.totalorder %s112, %s128
      %p130 = scmp.eq.s32.totalorder %s27, 0
      %p131 = por %p129, %p130
      %s133 = sadd.s32 %s132, 1
      %p136 = scmp.eq.s32.totalorder %s21, 7
      %p137 = scmp.ne.s32.totalorder %s132, %s134
      %p138 = scmp.eq.s32.totalorder %s21, 0
      %p139 = por %p137, %p138
      %p140 = scmp.ne.s32.totalorder %s132, %s134
      %p141 = scmp.eq.s32.totalorder %s26, 7
      %p142 = por %p140, %p141
      %p143 = scmp.ne.s32.totalorder %s134, %s135
      %p144 = scmp.eq.s32.totalorder %s26, 0
      %p145 = por %p143, %p144
      %p146 = scmp.ne.s32.totalorder %s134, %s135
      %p147 = scmp.eq.s32.totalorder %s27, 7
      %p148 = por %p146, %p147
      %p150 = scmp.ne.s32.totalorder %s135, %s149
      %p151 = scmp.eq.s32.totalorder %s27, 0
      %p152 = por %p150, %p151
      %s154 = sadd.s32 %s153, 1
      %p157 = scmp.eq.s32.totalorder %s21, 7
      %p158 = scmp.ne.s32.totalorder %s153, %s155
      %p159 = scmp.eq.s32.totalorder %s21, 0
      %p160 = por %p158, %p159
      %p161 = scmp.ne.s32.totalorder %s153, %s155
      %p162 = scmp.eq.s32.totalorder %s26, 7
      %p163 = por %p161, %p162
      %p164 = scmp.ne.s32.totalorder %s155, %s156
      %p165 = scmp.eq.s32.totalorder %s26, 0
      %p166 = por %p164, %p165
      %p167 = scmp.ne.s32.totalorder %s155, %s156
      %p168 = scmp.eq.s32.totalorder %s27, 7
      %p169 = por %p167, %p168
      %p171 = scmp.ne.s32.totalorder %s156, %s170
      %p172 = scmp.eq.s32.totalorder %s27, 0
      %p173 = por %p171, %p172
      %s174 = ssub.s32 %s28, %s47
      %s175 = ssub.s32 %s29, %s43
      %s176 = sor.u32 %s174, %s175
      %p177 = scmp.eq.s32.totalorder %s176, 0
      %s179 = sadd.s32 %s178, 1
      %s180 = scalar_select %p177, %s178, %s179
      %p183 = pneg %p177
      %p184 = scmp.eq.s32.totalorder %s21, 7
      %p185 = por %p183, %p184
      %p186 = scmp.ne.s32.totalorder %s178, %s181
      %p187 = scmp.eq.s32.totalorder %s21, 0
      %p188 = por %p186, %p187
      %p189 = scmp.ne.s32.totalorder %s178, %s181
      %p190 = scmp.eq.s32.totalorder %s26, 7
      %p191 = por %p189, %p190
      %p192 = scmp.ne.s32.totalorder %s181, %s182
      %p193 = scmp.eq.s32.totalorder %s26, 0
      %p194 = por %p192, %p193
      %p195 = scmp.ne.s32.totalorder %s181, %s182
      %p196 = scmp.eq.s32.totalorder %s27, 7
      %p197 = por %p195, %p196
      %p199 = scmp.ne.s32.totalorder %s182, %s198
      %p200 = scmp.eq.s32.totalorder %s27, 0
      %p201 = por %p199, %p200
      %p202 = scmp.le.s32.totalorder 1, %s21
      %p203 = scmp.lt.s32.totalorder %s21, 9
      %p204 = pnand %p202, %p203
      %p205 = pneg %p204
      // Predicated region
      $region9: #{tpu_custom_call.1} parent=5 // pred_check
        _
      $region10: #{tpu_custom_call.1} parent=5 // pred_check_branch
        %207 = sbr.rel (%p204) target = $region12
      $region11: #{tpu_custom_call.1} parent=5 // pred_region
        %s208 = ssub.s32 %s21, 1
        // Predicated region
        $region13: #{tpu_custom_call.1} parent=11 // pred_check
          %p209 = pneg %p145
        $region14: #{tpu_custom_call.1} parent=11 // pred_check_branch
          %211 = sbr.rel (%p209) target = $region16
        $region15: #{tpu_custom_call.1} parent=11 // pred_region
          %s213 = ssub.s32 512, 512
          %214 = vsyncadd [#allocation12], %s213
          %s215 = sshll.u32 [#allocation11], 4
          %s216 = int_to_ptr.vmem [resolvable:$true] %s215
          %221 = dma.hbm_to_vmem [thread:$0]  %s3, 512, %s216, [#allocation12], 128, 128, 8
        $region16: #{tpu_custom_call.1} parent=11 // pred_fallthru
          _
        // Predicated region
        $region17: #{tpu_custom_call.1} parent=11 // pred_check
          %p222 = pneg %p166
        $region18: #{tpu_custom_call.1} parent=11 // pred_check_branch
          %224 = sbr.rel (%p222) target = $region20
        $region19: #{tpu_custom_call.1} parent=11 // pred_region
          _
        $region20: #{tpu_custom_call.1} parent=11 // pred_fallthru
          _
      $region12: #{tpu_custom_call.1} parent=5 // pred_fallthru
        _
      %p225 = scmp.lt.s32.totalorder %s21, 8
      // Predicated region
      $region21: #{tpu_custom_call.1} parent=5 // pred_check
        %p226 = pneg %p225
      $region22: #{tpu_custom_call.1} parent=5 // pred_check_branch
        %228 = sbr.rel (%p226) target = $region24
      $region23: #{tpu_custom_call.1} parent=5 // pred_region
        // Predicated region
        $region25: #{tpu_custom_call.1} parent=23 // pred_check
          %p229 = pneg %p62
        $region26: #{tpu_custom_call.1} parent=23 // pred_check_branch
          %231 = sbr.rel (%p229) target = $region28
        $region27: #{tpu_custom_call.1} parent=23 // pred_region
          %s232 = sand.u32 %s52, 1
          %s233 = scalar_lea.sflag [#allocation6], %s232
          %s234 = sand.u32 %s52, 1
          %s235 = smul.addr %s234, 8
          %s236 = scalar_lea.vmem [#allocation5], %s235
          %s238 = ssub.s32 128, 128
          %239 = vsyncadd %s233, %s238
          %s240 = smul.addr %s28, 2
          %s241 = sadd.s32 %s29, %s240
          %s242 = smul.addr %s241, 128
          %s243 = scalar_lea.hbm %s0, %s242
          %s245 = sshll.u32 %s236, 4
          %s246 = int_to_ptr.vmem [resolvable:$true] %s245
          %248 = dma.hbm_to_vmem [thread:$0]  %s243, 128, %s246, %s233
        $region28: #{tpu_custom_call.1} parent=23 // pred_fallthru
          _
        // Predicated region
        $region29: #{tpu_custom_call.1} parent=23 // pred_check
          %p249 = pneg %p90
        $region30: #{tpu_custom_call.1} parent=23 // pred_check_branch
          %251 = sbr.rel (%p249) target = $region32
        $region31: #{tpu_custom_call.1} parent=23 // pred_region
          %s252 = sand.u32 %s21, 1
          %s253 = scalar_lea.sflag [#allocation9], %s252
          %s254 = sand.u32 %s80, 1
          %s255 = smul.addr %s254, 8
          %s256 = scalar_lea.vmem [#allocation8], %s255
          %s258 = ssub.s32 128, 128
          %259 = vsyncadd %s253, %s258
          %s260 = smul.addr %s28, 2
          %s261 = sadd.s32 %s30, %s260
          %s262 = smul.addr %s261, 128
          %s263 = scalar_lea.hbm %s1, %s262
          %s265 = sshll.u32 %s256, 4
          %s266 = int_to_ptr.vmem [resolvable:$true] %s265
          %268 = dma.hbm_to_vmem [thread:$0]  %s263, 128, %s266, %s253
        $region32: #{tpu_custom_call.1} parent=23 // pred_fallthru
          _
        // Predicated region
        $region33: #{tpu_custom_call.1} parent=23 // pred_check
          %p269 = pneg %p118
        $region34: #{tpu_custom_call.1} parent=23 // pred_check_branch
          %271 = sbr.rel (%p269) target = $region36
        $region35: #{tpu_custom_call.1} parent=23 // pred_region
          %s272 = sand.u32 %s21, 1
          %s273 = scalar_lea.sflag [#allocation9], %s272
          %s274 = sand.u32 %s108, 1
          %s275 = smul.addr %s274, 8
          %s276 = scalar_lea.vmem [#allocation10], %s275
          %s278 = ssub.s32 128, 128
          %279 = vsyncadd %s273, %s278
          %s280 = smul.addr %s28, 2
          %s281 = sadd.s32 %s30, %s280
          %s282 = smul.addr %s281, 128
          %s283 = scalar_lea.hbm %s2, %s282
          %s285 = sshll.u32 %s276, 4
          %s286 = int_to_ptr.vmem [resolvable:$true] %s285
          %288 = dma.hbm_to_vmem [thread:$0]  %s283, 128, %s286, %s273
        $region36: #{tpu_custom_call.1} parent=23 // pred_fallthru
          _
      $region24: #{tpu_custom_call.1} parent=5 // pred_fallthru
        _
      %p289 = scmp.le.s32.totalorder 1, %s21
      %p290 = scmp.lt.s32.totalorder %s21, 9
      %p291 = pnand %p289, %p290
      %p292 = pneg %p291
      // Predicated region
      $region37: #{tpu_custom_call.1} parent=5 // pred_check
        _
      $region38: #{tpu_custom_call.1} parent=5 // pred_check_branch
        %294 = sbr.rel (%p291) target = $region40
      $region39: #{tpu_custom_call.1} parent=5 // pred_region
        %s295 = ssub.s32 %s21, 1
        %s296 = sand.u32 %s55, 1
        %s297 = scalar_lea.sflag [#allocation6], %s296
        %s298 = sand.u32 %s55, 1
        %s299 = smul.addr %s298, 8
        %s300 = scalar_lea.vmem [#allocation5], %s299
        // Predicated region
        $region41: #{tpu_custom_call.1} parent=39 // pred_check
          %p301 = pneg %p68
        $region42: #{tpu_custom_call.1} parent=39 // pred_check_branch
          %303 = sbr.rel (%p301) target = $region44
        $region43: #{tpu_custom_call.1} parent=39 // pred_region
          %304 = dma.done %s297, 128
        $region44: #{tpu_custom_call.1} parent=39 // pred_fallthru
          _
        %s305 = sand.u32 %s26, 1
        %s306 = scalar_lea.sflag [#allocation9], %s305
        %s307 = sand.u32 %s83, 1
        %s308 = smul.addr %s307, 8
        %s309 = scalar_lea.vmem [#allocation8], %s308
        // Predicated region
        $region45: #{tpu_custom_call.1} parent=39 // pred_check
          %p310 = pneg %p96
        $region46: #{tpu_custom_call.1} parent=39 // pred_check_branch
          %312 = sbr.rel (%p310) target = $region48
        $region47: #{tpu_custom_call.1} parent=39 // pred_region
          %313 = dma.done %s306, 128
        $region48: #{tpu_custom_call.1} parent=39 // pred_fallthru
          _
        %s314 = sand.u32 %s26, 1
        %s315 = scalar_lea.sflag [#allocation9], %s314
        %s316 = sand.u32 %s111, 1
        %s317 = smul.addr %s316, 8
        %s318 = scalar_lea.vmem [#allocation10], %s317
        // Predicated region
        $region49: #{tpu_custom_call.1} parent=39 // pred_check
          %p319 = pneg %p124
        $region50: #{tpu_custom_call.1} parent=39 // pred_check_branch
          %321 = sbr.rel (%p319) target = $region52
        $region51: #{tpu_custom_call.1} parent=39 // pred_region
          %322 = dma.done %s315, 128
        $region52: #{tpu_custom_call.1} parent=39 // pred_fallthru
          _
        // Predicated region
        $region53: #{tpu_custom_call.1} parent=39 // pred_check
          %p323 = pneg %p145
        $region54: #{tpu_custom_call.1} parent=39 // pred_check_branch
          %325 = sbr.rel (%p323) target = $region56
        $region55: #{tpu_custom_call.1} parent=39 // pred_region
          %326 = dma.done [#allocation12], 512
        $region56: #{tpu_custom_call.1} parent=39 // pred_fallthru
          _
        %s327 = sand.u32 %s55, 1
        %s328 = scalar_lea.sflag [#allocation6], %s327
        %s329 = sand.u32 %s55, 1
        %s330 = smul.addr %s329, 8
        %s331 = scalar_lea.vmem [#allocation5], %s330
        %p332 = pneg %p68
        %p333 = pneg %p65
        %s334 = sand.u32 %s26, 1
        %s335 = scalar_lea.sflag [#allocation9], %s334
        %s336 = sand.u32 %s83, 1
        %s337 = smul.addr %s336, 8
        %s338 = scalar_lea.vmem [#allocation8], %s337
        %p339 = pneg %p96
        %p340 = pneg %p93
        %s341 = sand.u32 %s26, 1
        %s342 = scalar_lea.sflag [#allocation9], %s341
        %s343 = sand.u32 %s111, 1
        %s344 = smul.addr %s343, 8
        %s345 = scalar_lea.vmem [#allocation10], %s344
        %p346 = pneg %p124
        %p347 = pneg %p121
        %p348 = pneg %p145
        %p349 = pneg %p142
        %p350 = pneg %p166
        %p351 = pneg %p163
        %p352 = pneg %p194
        %p353 = pneg %p191
        %s354 = sand.u32 %s181, 1
        %s355 = scalar_lea.sflag [#allocation7], %s354
        %s356 = sand.u32 %s181, 1
        %s357 = smul.addr %s356, 8
        %s358 = scalar_lea.vmem [#allocation13], %s357
        %p359 = scmp.eq.s32.totalorder %s33, 0
        // Predicated region
        $region57: #{tpu_custom_call.1} parent=39 // pred_check
          %p360 = pneg %p359
        $region58: #{tpu_custom_call.1} parent=39 // pred_check_branch
          %362 = sbr.rel (%p360) target = $region60
        $region59: #{tpu_custom_call.1} parent=39 // pred_region
          %vm363 = vcmask 31744
          %364 = vst.msk [vmem:[#allocation2] sm:$0xff] %vm363, -inf
          %365 = vst.msk [vmem:[#allocation3] sm:$0xff] %vm363, 0.0
          %vm366 = vcmask 261120
          %367 = vst.msk [vmem:[#allocation4] sm:$0xff] %vm366, 0.0
        $region60: #{tpu_custom_call.1} parent=39 // pred_fallthru
          _
        %v368 = vld [vmem:[%s300] sm:$0xff]
        %v369 = vld [vmem:[%s309] sm:$0xff]
        %v370 = vld [vmem:[%s318] sm:$0xff]
        %v371 = vld [vmem:[#allocation2] sm:$0xff]
        %v372 = vld [vmem:[#allocation3] sm:$0xff]
        %vm373 = vcmask 64512
        %v375 = vsel %vm373, %v368, 0
        %v378 = vsel %vm373, %v369, 0
        %380 = vmatprep.subr.mxu0 0.0
        %381 = vmatpush1.xpose.msra.mxu0 %v378
        %382 = vmatprep.subr.mxu0 0.0
        %383 = vmatpush1.xpose.msra.mxu0 0.0
        %384 = vmatprep.subr.mxu0 0.0
        %385 = vmatpush1.xpose.msra.mxu0 0.0
        %386 = vmatprep.subr.mxu0 0.0
        %387 = vmatpush1.xpose.msra.mxu0 0.0
        %388 = vmatprep.subr.mxu0 0.0
        %389 = vmatpush1.xpose.msra.mxu0 0.0
        %390 = vmatprep.subr.mxu0 0.0
        %391 = vmatpush1.xpose.msra.mxu0 0.0
        %392 = vmatprep.subr.mxu0 0.0
        %393 = vmatpush1.xpose.msra.mxu0 0.0
        %394 = vmatprep.subr.mxu0 0.0
        %395 = vmatpush1.xpose.msra.mxu0 0.0
        %396 = vmatprep.subr.mxu0 0.0
        %397 = vmatpush1.xpose.msra.mxu0 0.0
        %398 = vmatprep.subr.mxu0 0.0
        %399 = vmatpush1.xpose.msra.mxu0 0.0
        %400 = vmatprep.subr.mxu0 0.0
        %401 = vmatpush1.xpose.msra.mxu0 0.0
        %402 = vmatprep.subr.mxu0 0.0
        %403 = vmatpush1.xpose.msra.mxu0 0.0
        %404 = vmatprep.subr.mxu0 0.0
        %405 = vmatpush1.xpose.msra.mxu0 0.0
        %406 = vmatprep.subr.mxu0 0.0
        %407 = vmatpush1.xpose.msra.mxu0 0.0
        %408 = vmatprep.subr.mxu0 0.0
        %409 = vmatpush1.xpose.msra.mxu0 0.0
        %410 = vmatprep.subr.mxu0 0.0
        %411 = vmatpush1.xpose.msra.mxu0 0.0
        %412 = vmatprep.subr.mxu0 0.0
        %413 = vmatpush1.xpose.msra.mxu0 0.0
        %414 = vmatprep.subr.mxu0 0.0
        %415 = vmatpush1.xpose.msra.mxu0 0.0
        %416 = vmatprep.subr.mxu0 0.0
        %417 = vmatpush1.xpose.msra.mxu0 0.0
        %418 = vmatprep.subr.mxu0 0.0
        %419 = vmatpush1.xpose.msra.mxu0 0.0
        %420 = vmatprep.subr.mxu0 0.0
        %421 = vmatpush1.xpose.msra.mxu0 0.0
        %422 = vmatprep.subr.mxu0 0.0
        %423 = vmatpush1.xpose.msra.mxu0 0.0
        %424 = vmatprep.subr.mxu0 0.0
        %425 = vmatpush1.xpose.msra.mxu0 0.0
        %426 = vmatprep.subr.mxu0 0.0
        %427 = vmatpush1.xpose.msra.mxu0 0.0
        %428 = vmatprep.subr.mxu0 0.0
        %429 = vmatpush1.xpose.msra.mxu0 0.0
        %430 = vmatprep.subr.mxu0 0.0
        %431 = vmatpush1.xpose.msra.mxu0 0.0
        %432 = vmatprep.subr.mxu0 0.0
        %433 = vmatpush1.xpose.msra.mxu0 0.0
        %434 = vmatprep.subr.mxu0 0.0
        %435 = vmatpush1.xpose.msra.mxu0 0.0
        %436 = vmatprep.subr.mxu0 0.0
        %437 = vmatpush1.xpose.msra.mxu0 0.0
        %438 = vmatprep.subr.mxu0 0.0
        %439 = vmatpush1.xpose.msra.mxu0 0.0
        %440 = vmatprep.subr.mxu0 0.0
        %441 = vmatpush1.xpose.msra.mxu0 0.0
        %442 = vmatprep.subr.mxu0 0.0
        %443 = vmatpush1.xpose.msra.mxu0 0.0
        %444 = vmatprep.mubr.f32.mxu0 0.0
        %445 = vmatmul.mubr.f32.gmra.mrb[0].mxu0 %v375
        %v446 = vpop.f32.mrb[0].mxu0
        %v447 = vadd.f32 0.0, %v446
        %v448 = vpop.f32.mrb[0].mxu0
        %449 = vdwg.mxu0
        %v450 = vsel %vm373, %v447, -inf
        %451 = vmax.xlane.f32.xlu0 %v450
        %v452 = vpop.xlane.xlu0 %451
        %v453 = vmax.f32 %v371, %v452
        %v454 = vsub.f32 %v371, %v453
        %v455 = vmul.f32 %v454, 1.442695
        %v456 = vpow.pop %v455
        %458 = vset.pattern.permute.xlu0 0
        %459 = vperm.xlu0 %458, %v453
        %v460 = vpop.permute.xlu0 %459
        %v462 = vsub.f32 %v447, %v460
        %v463 = vmul.f32 %v462, 1.442695
        %v464 = vpow.pop %v463
        %v465 = vmul.f32 %v456, %v372
        %v466 = vsel %vm373, %v464, 0.0
        %467 = vadd.xlane.f32.xlu0 %v466
        %v468 = vpop.xlane.xlu0 %467
        %v469 = vadd.f32 %v465, %v468
        %v471 = vsel %vm373, %v464, 0
        %473 = vmatprep.subr.mxu0 0.0
        %474 = vmatpush1.msra.mxu0 %v370
        %475 = vmatprep.subr.mxu0 0.0
        %476 = vmatpush1.msra.mxu0 0.0
        %477 = vmatprep.subr.mxu0 0.0
        %478 = vmatpush1.msra.mxu0 0.0
        %479 = vmatprep.subr.mxu0 0.0
        %480 = vmatpush1.msra.mxu0 0.0
        %481 = vmatprep.subr.mxu0 0.0
        %482 = vmatpush1.msra.mxu0 0.0
        %483 = vmatprep.subr.mxu0 0.0
        %484 = vmatpush1.msra.mxu0 0.0
        %485 = vmatprep.subr.mxu0 0.0
        %486 = vmatpush1.msra.mxu0 0.0
        %487 = vmatprep.subr.mxu0 0.0
        %488 = vmatpush1.msra.mxu0 0.0
        %489 = vmatprep.subr.mxu0 0.0
        %490 = vmatpush1.msra.mxu0 0.0
        %491 = vmatprep.subr.mxu0 0.0
        %492 = vmatpush1.msra.mxu0 0.0
        %493 = vmatprep.subr.mxu0 0.0
        %494 = vmatpush1.msra.mxu0 0.0
        %495 = vmatprep.subr.mxu0 0.0
        %496 = vmatpush1.msra.mxu0 0.0
        %497 = vmatprep.subr.mxu0 0.0
        %498 = vmatpush1.msra.mxu0 0.0
        %499 = vmatprep.subr.mxu0 0.0
        %500 = vmatpush1.msra.mxu0 0.0
        %501 = vmatprep.subr.mxu0 0.0
        %502 = vmatpush1.msra.mxu0 0.0
        %503 = vmatprep.subr.mxu0 0.0
        %504 = vmatpush1.msra.mxu0 0.0
        %505 = vmatprep.subr.mxu0 0.0
        %506 = vmatpush1.msra.mxu0 0.0
        %507 = vmatprep.subr.mxu0 0.0
        %508 = vmatpush1.msra.mxu0 0.0
        %509 = vmatprep.subr.mxu0 0.0
        %510 = vmatpush1.msra.mxu0 0.0
        %511 = vmatprep.subr.mxu0 0.0
        %512 = vmatpush1.msra.mxu0 0.0
        %513 = vmatprep.subr.mxu0 0.0
        %514 = vmatpush1.msra.mxu0 0.0
        %515 = vmatprep.subr.mxu0 0.0
        %516 = vmatpush1.msra.mxu0 0.0
        %517 = vmatprep.subr.mxu0 0.0
        %518 = vmatpush1.msra.mxu0 0.0
        %519 = vmatprep.subr.mxu0 0.0
        %520 = vmatpush1.msra.mxu0 0.0
        %521 = vmatprep.subr.mxu0 0.0
        %522 = vmatpush1.msra.mxu0 0.0
        %523 = vmatprep.subr.mxu0 0.0
        %524 = vmatpush1.msra.mxu0 0.0
        %525 = vmatprep.subr.mxu0 0.0
        %526 = vmatpush1.msra.mxu0 0.0
        %527 = vmatprep.subr.mxu0 0.0
        %528 = vmatpush1.msra.mxu0 0.0
        %529 = vmatprep.subr.mxu0 0.0
        %530 = vmatpush1.msra.mxu0 0.0
        %531 = vmatprep.subr.mxu0 0.0
        %532 = vmatpush1.msra.mxu0 0.0
        %533 = vmatprep.subr.mxu0 0.0
        %534 = vmatpush1.msra.mxu0 0.0
        %535 = vmatprep.subr.mxu0 0.0
        %536 = vmatpush1.msra.mxu0 0.0
        %537 = vmatprep.mubr.f32.mxu0 0.0
        %538 = vmatmul.mubr.f32.gmra.mrb[0].mxu0 %v471
        %v539 = vpop.f32.mrb[0].mxu0
        %v540 = vadd.f32 0.0, %v539
        %v541 = vpop.f32.mrb[0].mxu0
        %542 = vdwg.mxu0
        %544 = vset.pattern.permute.xlu0 0
        %545 = vperm.xlu0 %544, %v456
        %v546 = vpop.permute.xlu0 %545
        %548 = vrot.lane.b32.xlu0 %v368, 120
        %v549 = vpop.permute.xlu0 %548
        %550 = vrot.lane.b32.xlu0 %v369, 120
        %v551 = vpop.permute.xlu0 %550
        %v552 = vsel %vm373, %v549, 0
        %v554 = vsel %vm373, %v551, 0
        %556 = vmatprep.subr.mxu0 0.0
        %557 = vmatpush1.xpose.msra.mxu0 %v554
        %558 = vmatprep.subr.mxu0 0.0
        %559 = vmatpush1.xpose.msra.mxu0 0.0
        %560 = vmatprep.subr.mxu0 0.0
        %561 = vmatpush1.xpose.msra.mxu0 0.0
        %562 = vmatprep.subr.mxu0 0.0
        %563 = vmatpush1.xpose.msra.mxu0 0.0
        %564 = vmatprep.subr.mxu0 0.0
        %565 = vmatpush1.xpose.msra.mxu0 0.0
        %566 = vmatprep.subr.mxu0 0.0
        %567 = vmatpush1.xpose.msra.mxu0 0.0
        %568 = vmatprep.subr.mxu0 0.0
        %569 = vmatpush1.xpose.msra.mxu0 0.0
        %570 = vmatprep.subr.mxu0 0.0
        %571 = vmatpush1.xpose.msra.mxu0 0.0
        %572 = vmatprep.subr.mxu0 0.0
        %573 = vmatpush1.xpose.msra.mxu0 0.0
        %574 = vmatprep.subr.mxu0 0.0
        %575 = vmatpush1.xpose.msra.mxu0 0.0
        %576 = vmatprep.subr.mxu0 0.0
        %577 = vmatpush1.xpose.msra.mxu0 0.0
        %578 = vmatprep.subr.mxu0 0.0
        %579 = vmatpush1.xpose.msra.mxu0 0.0
        %580 = vmatprep.subr.mxu0 0.0
        %581 = vmatpush1.xpose.msra.mxu0 0.0
        %582 = vmatprep.subr.mxu0 0.0
        %583 = vmatpush1.xpose.msra.mxu0 0.0
        %584 = vmatprep.subr.mxu0 0.0
        %585 = vmatpush1.xpose.msra.mxu0 0.0
        %586 = vmatprep.subr.mxu0 0.0
        %587 = vmatpush1.xpose.msra.mxu0 0.0
        %588 = vmatprep.subr.mxu0 0.0
        %589 = vmatpush1.xpose.msra.mxu0 0.0
        %590 = vmatprep.subr.mxu0 0.0
        %591 = vmatpush1.xpose.msra.mxu0 0.0
        %592 = vmatprep.subr.mxu0 0.0
        %593 = vmatpush1.xpose.msra.mxu0 0.0
        %594 = vmatprep.subr.mxu0 0.0
        %595 = vmatpush1.xpose.msra.mxu0 0.0
        %596 = vmatprep.subr.mxu0 0.0
        %597 = vmatpush1.xpose.msra.mxu0 0.0
        %598 = vmatprep.subr.mxu0 0.0
        %599 = vmatpush1.xpose.msra.mxu0 0.0
        %600 = vmatprep.subr.mxu0 0.0
        %601 = vmatpush1.xpose.msra.mxu0 0.0
        %602 = vmatprep.subr.mxu0 0.0
        %603 = vmatpush1.xpose.msra.mxu0 0.0
        %604 = vmatprep.subr.mxu0 0.0
        %605 = vmatpush1.xpose.msra.mxu0 0.0
        %606 = vmatprep.subr.mxu0 0.0
        %607 = vmatpush1.xpose.msra.mxu0 0.0
        %608 = vmatprep.subr.mxu0 0.0
        %609 = vmatpush1.xpose.msra.mxu0 0.0
        %610 = vmatprep.subr.mxu0 0.0
        %611 = vmatpush1.xpose.msra.mxu0 0.0
        %612 = vmatprep.subr.mxu0 0.0
        %613 = vmatpush1.xpose.msra.mxu0 0.0
        %614 = vmatprep.subr.mxu0 0.0
        %615 = vmatpush1.xpose.msra.mxu0 0.0
        %616 = vmatprep.subr.mxu0 0.0
        %617 = vmatpush1.xpose.msra.mxu0 0.0
        %618 = vmatprep.subr.mxu0 0.0
        %619 = vmatpush1.xpose.msra.mxu0 0.0
        %620 = vmatprep.mubr.f32.mxu0 0.0
        %621 = vmatmul.mubr.f32.gmra.mrb[0].mxu0 %v552
        %v622 = vpop.f32.mrb[0].mxu0
        %v623 = vadd.f32 0.0, %v622
        %v624 = vpop.f32.mrb[0].mxu0
        %625 = vdwg.mxu0
        %v626 = vsel %vm373, %v623, -inf
        %627 = vmax.xlane.f32.xlu0 %v626
        %v628 = vpop.xlane.xlu0 %627
        %v629 = vmax.f32 %v371, %v628
        %v630 = vsub.f32 %v371, %v629
        %v631 = vmul.f32 %v630, 1.442695
        %v632 = vpow.pop %v631
        %634 = vset.pattern.permute.xlu0 1
        %635 = vperm.xlu0 %634, %v629
        %v636 = vpop.permute.xlu0 %635
        %v638 = vsub.f32 %v623, %v636
        %v639 = vmul.f32 %v638, 1.442695
        %v640 = vpow.pop %v639
        %v641 = vmul.f32 %v632, %v372
        %v642 = vsel %vm373, %v640, 0.0
        %643 = vadd.xlane.f32.xlu0 %v642
        %v644 = vpop.xlane.xlu0 %643
        %v645 = vadd.f32 %v641, %v644
        %647 = vrot.lane.b32.xlu0 %v370, 120
        %v648 = vpop.permute.xlu0 %647
        %v651 = vsel %vm373, %v640, 0
        %653 = vmatprep.subr.mxu0 0.0
        %654 = vmatpush1.msra.mxu0 %v648
        %655 = vmatprep.subr.mxu0 0.0
        %656 = vmatpush1.msra.mxu0 0.0
        %657 = vmatprep.subr.mxu0 0.0
        %658 = vmatpush1.msra.mxu0 0.0
        %659 = vmatprep.subr.mxu0 0.0
        %660 = vmatpush1.msra.mxu0 0.0
        %661 = vmatprep.subr.mxu0 0.0
        %662 = vmatpush1.msra.mxu0 0.0
        %663 = vmatprep.subr.mxu0 0.0
        %664 = vmatpush1.msra.mxu0 0.0
        %665 = vmatprep.subr.mxu0 0.0
        %666 = vmatpush1.msra.mxu0 0.0
        %667 = vmatprep.subr.mxu0 0.0
        %668 = vmatpush1.msra.mxu0 0.0
        %669 = vmatprep.subr.mxu0 0.0
        %670 = vmatpush1.msra.mxu0 0.0
        %671 = vmatprep.subr.mxu0 0.0
        %672 = vmatpush1.msra.mxu0 0.0
        %673 = vmatprep.subr.mxu0 0.0
        %674 = vmatpush1.msra.mxu0 0.0
        %675 = vmatprep.subr.mxu0 0.0
        %676 = vmatpush1.msra.mxu0 0.0
        %677 = vmatprep.subr.mxu0 0.0
        %678 = vmatpush1.msra.mxu0 0.0
        %679 = vmatprep.subr.mxu0 0.0
        %680 = vmatpush1.msra.mxu0 0.0
        %681 = vmatprep.subr.mxu0 0.0
        %682 = vmatpush1.msra.mxu0 0.0
        %683 = vmatprep.subr.mxu0 0.0
        %684 = vmatpush1.msra.mxu0 0.0
        %685 = vmatprep.subr.mxu0 0.0
        %686 = vmatpush1.msra.mxu0 0.0
        %687 = vmatprep.subr.mxu0 0.0
        %688 = vmatpush1.msra.mxu0 0.0
        %689 = vmatprep.subr.mxu0 0.0
        %690 = vmatpush1.msra.mxu0 0.0
        %691 = vmatprep.subr.mxu0 0.0
        %692 = vmatpush1.msra.mxu0 0.0
        %693 = vmatprep.subr.mxu0 0.0
        %694 = vmatpush1.msra.mxu0 0.0
        %695 = vmatprep.subr.mxu0 0.0
        %696 = vmatpush1.msra.mxu0 0.0
        %697 = vmatprep.subr.mxu0 0.0
        %698 = vmatpush1.msra.mxu0 0.0
        %699 = vmatprep.subr.mxu0 0.0
        %700 = vmatpush1.msra.mxu0 0.0
        %701 = vmatprep.subr.mxu0 0.0
        %702 = vmatpush1.msra.mxu0 0.0
        %703 = vmatprep.subr.mxu0 0.0
        %704 = vmatpush1.msra.mxu0 0.0
        %705 = vmatprep.subr.mxu0 0.0
        %706 = vmatpush1.msra.mxu0 0.0
        %707 = vmatprep.subr.mxu0 0.0
        %708 = vmatpush1.msra.mxu0 0.0
        %709 = vmatprep.subr.mxu0 0.0
        %710 = vmatpush1.msra.mxu0 0.0
        %711 = vmatprep.subr.mxu0 0.0
        %712 = vmatpush1.msra.mxu0 0.0
        %713 = vmatprep.subr.mxu0 0.0
        %714 = vmatpush1.msra.mxu0 0.0
        %715 = vmatprep.subr.mxu0 0.0
        %716 = vmatpush1.msra.mxu0 0.0
        %717 = vmatprep.mubr.f32.mxu0 0.0
        %718 = vmatmul.mubr.f32.gmra.mrb[0].mxu0 %v651
        %v719 = vpop.f32.mrb[0].mxu0
        %v720 = vadd.f32 0.0, %v719
        %v721 = vpop.f32.mrb[0].mxu0
        %722 = vdwg.mxu0
        %724 = vset.pattern.permute.xlu0 1
        %725 = vperm.xlu0 %724, %v632
        %v726 = vpop.permute.xlu0 %725
        %728 = vrot.lane.b32.xlu0 %v368, 112
        %v729 = vpop.permute.xlu0 %728
        %730 = vrot.lane.b32.xlu0 %v369, 112
        %v731 = vpop.permute.xlu0 %730
        %v732 = vsel %vm373, %v729, 0
        %v734 = vsel %vm373, %v731, 0
        %736 = vmatprep.subr.mxu0 0.0
        %737 = vmatpush1.xpose.msra.mxu0 %v734
        %738 = vmatprep.subr.mxu0 0.0
        %739 = vmatpush1.xpose.msra.mxu0 0.0
        %740 = vmatprep.subr.mxu0 0.0
        %741 = vmatpush1.xpose.msra.mxu0 0.0
        %742 = vmatprep.subr.mxu0 0.0
        %743 = vmatpush1.xpose.msra.mxu0 0.0
        %744 = vmatprep.subr.mxu0 0.0
        %745 = vmatpush1.xpose.msra.mxu0 0.0
        %746 = vmatprep.subr.mxu0 0.0
        %747 = vmatpush1.xpose.msra.mxu0 0.0
        %748 = vmatprep.subr.mxu0 0.0
        %749 = vmatpush1.xpose.msra.mxu0 0.0
        %750 = vmatprep.subr.mxu0 0.0
        %751 = vmatpush1.xpose.msra.mxu0 0.0
        %752 = vmatprep.subr.mxu0 0.0
        %753 = vmatpush1.xpose.msra.mxu0 0.0
        %754 = vmatprep.subr.mxu0 0.0
        %755 = vmatpush1.xpose.msra.mxu0 0.0
        %756 = vmatprep.subr.mxu0 0.0
        %757 = vmatpush1.xpose.msra.mxu0 0.0
        %758 = vmatprep.subr.mxu0 0.0
        %759 = vmatpush1.xpose.msra.mxu0 0.0
        %760 = vmatprep.subr.mxu0 0.0
        %761 = vmatpush1.xpose.msra.mxu0 0.0
        %762 = vmatprep.subr.mxu0 0.0
        %763 = vmatpush1.xpose.msra.mxu0 0.0
        %764 = vmatprep.subr.mxu0 0.0
        %765 = vmatpush1.xpose.msra.mxu0 0.0
        %766 = vmatprep.subr.mxu0 0.0
        %767 = vmatpush1.xpose.msra.mxu0 0.0
        %768 = vmatprep.subr.mxu0 0.0
        %769 = vmatpush1.xpose.msra.mxu0 0.0
        %770 = vmatprep.subr.mxu0 0.0
        %771 = vmatpush1.xpose.msra.mxu0 0.0
        %772 = vmatprep.subr.mxu0 0.0
        %773 = vmatpush1.xpose.msra.mxu0 0.0
        %774 = vmatprep.subr.mxu0 0.0
        %775 = vmatpush1.xpose.msra.mxu0 0.0
        %776 = vmatprep.subr.mxu0 0.0
        %777 = vmatpush1.xpose.msra.mxu0 0.0
        %778 = vmatprep.subr.mxu0 0.0
        %779 = vmatpush1.xpose.msra.mxu0 0.0
        %780 = vmatprep.subr.mxu0 0.0
        %781 = vmatpush1.xpose.msra.mxu0 0.0
        %782 = vmatprep.subr.mxu0 0.0
        %783 = vmatpush1.xpose.msra.mxu0 0.0
        %784 = vmatprep.subr.mxu0 0.0
        %785 = vmatpush1.xpose.msra.mxu0 0.0
        %786 = vmatprep.subr.mxu0 0.0
        %787 = vmatpush1.xpose.msra.mxu0 0.0
        %788 = vmatprep.subr.mxu0 0.0
        %789 = vmatpush1.xpose.msra.mxu0 0.0
        %790 = vmatprep.subr.mxu0 0.0
        %791 = vmatpush1.xpose.msra.mxu0 0.0
        %792 = vmatprep.subr.mxu0 0.0
        %793 = vmatpush1.xpose.msra.mxu0 0.0
        %794 = vmatprep.subr.mxu0 0.0
        %795 = vmatpush1.xpose.msra.mxu0 0.0
        %796 = vmatprep.subr.mxu0 0.0
        %797 = vmatpush1.xpose.msra.mxu0 0.0
        %798 = vmatprep.subr.mxu0 0.0
        %799 = vmatpush1.xpose.msra.mxu0 0.0
        %800 = vmatprep.mubr.f32.mxu0 0.0
        %801 = vmatmul.mubr.f32.gmra.mrb[0].mxu0 %v732
        %v802 = vpop.f32.mrb[0].mxu0
        %v803 = vadd.f32 0.0, %v802
        %v804 = vpop.f32.mrb[0].mxu0
        %805 = vdwg.mxu0
        %v806 = vsel %vm373, %v803, -inf
        %807 = vmax.xlane.f32.xlu0 %v806
        %v808 = vpop.xlane.xlu0 %807
        %v809 = vmax.f32 %v371, %v808
        %v810 = vsub.f32 %v371, %v809
        %v811 = vmul.f32 %v810, 1.442695
        %v812 = vpow.pop %v811
        %814 = vset.pattern.permute.xlu0 2
        %815 = vperm.xlu0 %814, %v809
        %v816 = vpop.permute.xlu0 %815
        %v818 = vsub.f32 %v803, %v816
        %v819 = vmul.f32 %v818, 1.442695
        %v820 = vpow.pop %v819
        %v821 = vmul.f32 %v812, %v372
        %v822 = vsel %vm373, %v820, 0.0
        %823 = vadd.xlane.f32.xlu0 %v822
        %v824 = vpop.xlane.xlu0 %823
        %v825 = vadd.f32 %v821, %v824
        %826 = vrot.lane.b32.xlu0 %v370, 112
        %v827 = vpop.permute.xlu0 %826
        %v830 = vsel %vm373, %v820, 0
        %832 = vmatprep.subr.mxu0 0.0
        %833 = vmatpush1.msra.mxu0 %v827
        %834 = vmatprep.subr.mxu0 0.0
        %835 = vmatpush1.msra.mxu0 0.0
        %836 = vmatprep.subr.mxu0 0.0
        %837 = vmatpush1.msra.mxu0 0.0
        %838 = vmatprep.subr.mxu0 0.0
        %839 = vmatpush1.msra.mxu0 0.0
        %840 = vmatprep.subr.mxu0 0.0
        %841 = vmatpush1.msra.mxu0 0.0
        %842 = vmatprep.subr.mxu0 0.0
        %843 = vmatpush1.msra.mxu0 0.0
        %844 = vmatprep.subr.mxu0 0.0
        %845 = vmatpush1.msra.mxu0 0.0
        %846 = vmatprep.subr.mxu0 0.0
        %847 = vmatpush1.msra.mxu0 0.0
        %848 = vmatprep.subr.mxu0 0.0
        %849 = vmatpush1.msra.mxu0 0.0
        %850 = vmatprep.subr.mxu0 0.0
        %851 = vmatpush1.msra.mxu0 0.0
        %852 = vmatprep.subr.mxu0 0.0
        %853 = vmatpush1.msra.mxu0 0.0
        %854 = vmatprep.subr.mxu0 0.0
        %855 = vmatpush1.msra.mxu0 0.0
        %856 = vmatprep.subr.mxu0 0.0
        %857 = vmatpush1.msra.mxu0 0.0
        %858 = vmatprep.subr.mxu0 0.0
        %859 = vmatpush1.msra.mxu0 0.0
        %860 = vmatprep.subr.mxu0 0.0
        %861 = vmatpush1.msra.mxu0 0.0
        %862 = vmatprep.subr.mxu0 0.0
        %863 = vmatpush1.msra.mxu0 0.0
        %864 = vmatprep.subr.mxu0 0.0
        %865 = vmatpush1.msra.mxu0 0.0
        %866 = vmatprep.subr.mxu0 0.0
        %867 = vmatpush1.msra.mxu0 0.0
        %868 = vmatprep.subr.mxu0 0.0
        %869 = vmatpush1.msra.mxu0 0.0
        %870 = vmatprep.subr.mxu0 0.0
        %871 = vmatpush1.msra.mxu0 0.0
        %872 = vmatprep.subr.mxu0 0.0
        %873 = vmatpush1.msra.mxu0 0.0
        %874 = vmatprep.subr.mxu0 0.0
        %875 = vmatpush1.msra.mxu0 0.0
        %876 = vmatprep.subr.mxu0 0.0
        %877 = vmatpush1.msra.mxu0 0.0
        %878 = vmatprep.subr.mxu0 0.0
        %879 = vmatpush1.msra.mxu0 0.0
        %880 = vmatprep.subr.mxu0 0.0
        %881 = vmatpush1.msra.mxu0 0.0
        %882 = vmatprep.subr.mxu0 0.0
        %883 = vmatpush1.msra.mxu0 0.0
        %884 = vmatprep.subr.mxu0 0.0
        %885 = vmatpush1.msra.mxu0 0.0
        %886 = vmatprep.subr.mxu0 0.0
        %887 = vmatpush1.msra.mxu0 0.0
        %888 = vmatprep.subr.mxu0 0.0
        %889 = vmatpush1.msra.mxu0 0.0
        %890 = vmatprep.subr.mxu0 0.0
        %891 = vmatpush1.msra.mxu0 0.0
        %892 = vmatprep.subr.mxu0 0.0
        %893 = vmatpush1.msra.mxu0 0.0
        %894 = vmatprep.subr.mxu0 0.0
        %895 = vmatpush1.msra.mxu0 0.0
        %896 = vmatprep.mubr.f32.mxu0 0.0
        %897 = vmatmul.mubr.f32.gmra.mrb[0].mxu0 %v830
        %v898 = vpop.f32.mrb[0].mxu0
        %v899 = vadd.f32 0.0, %v898
        %v900 = vpop.f32.mrb[0].mxu0
        %901 = vdwg.mxu0
        %903 = vset.pattern.permute.xlu0 2
        %904 = vperm.xlu0 %903, %v812
        %v905 = vpop.permute.xlu0 %904
        %907 = vrot.lane.b32.xlu0 %v368, 104
        %v908 = vpop.permute.xlu0 %907
        %909 = vrot.lane.b32.xlu0 %v369, 104
        %v910 = vpop.permute.xlu0 %909
        %v911 = vsel %vm373, %v908, 0
        %v913 = vsel %vm373, %v910, 0
        %915 = vmatprep.subr.mxu0 0.0
        %916 = vmatpush1.xpose.msra.mxu0 %v913
        %917 = vmatprep.subr.mxu0 0.0
        %918 = vmatpush1.xpose.msra.mxu0 0.0
        %919 = vmatprep.subr.mxu0 0.0
        %920 = vmatpush1.xpose.msra.mxu0 0.0
        %921 = vmatprep.subr.mxu0 0.0
        %922 = vmatpush1.xpose.msra.mxu0 0.0
        %923 = vmatprep.subr.mxu0 0.0
        %924 = vmatpush1.xpose.msra.mxu0 0.0
        %925 = vmatprep.subr.mxu0 0.0
        %926 = vmatpush1.xpose.msra.mxu0 0.0
        %927 = vmatprep.subr.mxu0 0.0
        %928 = vmatpush1.xpose.msra.mxu0 0.0
        %929 = vmatprep.subr.mxu0 0.0
        %930 = vmatpush1.xpose.msra.mxu0 0.0
        %931 = vmatprep.subr.mxu0 0.0
        %932 = vmatpush1.xpose.msra.mxu0 0.0
        %933 = vmatprep.subr.mxu0 0.0
        %934 = vmatpush1.xpose.msra.mxu0 0.0
        %935 = vmatprep.subr.mxu0 0.0
        %936 = vmatpush1.xpose.msra.mxu0 0.0
        %937 = vmatprep.subr.mxu0 0.0
        %938 = vmatpush1.xpose.msra.mxu0 0.0
        %939 = vmatprep.subr.mxu0 0.0
        %940 = vmatpush1.xpose.msra.mxu0 0.0
        %941 = vmatprep.subr.mxu0 0.0
        %942 = vmatpush1.xpose.msra.mxu0 0.0
        %943 = vmatprep.subr.mxu0 0.0
        %944 = vmatpush1.xpose.msra.mxu0 0.0
        %945 = vmatprep.subr.mxu0 0.0
        %946 = vmatpush1.xpose.msra.mxu0 0.0
        %947 = vmatprep.subr.mxu0 0.0
        %948 = vmatpush1.xpose.msra.mxu0 0.0
        %949 = vmatprep.subr.mxu0 0.0
        %950 = vmatpush1.xpose.msra.mxu0 0.0
        %951 = vmatprep.subr.mxu0 0.0
        %952 = vmatpush1.xpose.msra.mxu0 0.0
        %953 = vmatprep.subr.mxu0 0.0
        %954 = vmatpush1.xpose.msra.mxu0 0.0
        %955 = vmatprep.subr.mxu0 0.0
        %956 = vmatpush1.xpose.msra.mxu0 0.0
        %957 = vmatprep.subr.mxu0 0.0
        %958 = vmatpush1.xpose.msra.mxu0 0.0
        %959 = vmatprep.subr.mxu0 0.0
        %960 = vmatpush1.xpose.msra.mxu0 0.0
        %961 = vmatprep.subr.mxu0 0.0
        %962 = vmatpush1.xpose.msra.mxu0 0.0
        %963 = vmatprep.subr.mxu0 0.0
        %964 = vmatpush1.xpose.msra.mxu0 0.0
        %965 = vmatprep.subr.mxu0 0.0
        %966 = vmatpush1.xpose.msra.mxu0 0.0
        %967 = vmatprep.subr.mxu0 0.0
        %968 = vmatpush1.xpose.msra.mxu0 0.0
        %969 = vmatprep.subr.mxu0 0.0
        %970 = vmatpush1.xpose.msra.mxu0 0.0
        %971 = vmatprep.subr.mxu0 0.0
        %972 = vmatpush1.xpose.msra.mxu0 0.0
        %973 = vmatprep.subr.mxu0 0.0
        %974 = vmatpush1.xpose.msra.mxu0 0.0
        %975 = vmatprep.subr.mxu0 0.0
        %976 = vmatpush1.xpose.msra.mxu0 0.0
        %977 = vmatprep.subr.mxu0 0.0
        %978 = vmatpush1.xpose.msra.mxu0 0.0
        %979 = vmatprep.mubr.f32.mxu0 0.0
        %980 = vmatmul.mubr.f32.gmra.mrb[0].mxu0 %v911
        %v981 = vpop.f32.mrb[0].mxu0
        %v982 = vadd.f32 0.0, %v981
        %v983 = vpop.f32.mrb[0].mxu0
        %984 = vdwg.mxu0
        %v985 = vsel %vm373, %v982, -inf
        %986 = vmax.xlane.f32.xlu0 %v985
        %v987 = vpop.xlane.xlu0 %986
        %v988 = vmax.f32 %v371, %v987
        %v989 = vsub.f32 %v371, %v988
        %v990 = vmul.f32 %v989, 1.442695
        %v991 = vpow.pop %v990
        %993 = vset.pattern.permute.xlu0 3
        %994 = vperm.xlu0 %993, %v988
        %v995 = vpop.permute.xlu0 %994
        %v997 = vsub.f32 %v982, %v995
        %v998 = vmul.f32 %v997, 1.442695
        %v999 = vpow.pop %v998
        %v1000 = vmul.f32 %v991, %v372
        %v1001 = vsel %vm373, %v999, 0.0
        %1002 = vadd.xlane.f32.xlu0 %v1001
        %v1003 = vpop.xlane.xlu0 %1002
        %v1004 = vadd.f32 %v1000, %v1003
        %1005 = vrot.lane.b32.xlu0 %v370, 104
        %v1006 = vpop.permute.xlu0 %1005
        %v1009 = vsel %vm373, %v999, 0
        %1011 = vmatprep.subr.mxu0 0.0
        %1012 = vmatpush1.msra.mxu0 %v1006
        %1013 = vmatprep.subr.mxu0 0.0
        %1014 = vmatpush1.msra.mxu0 0.0
        %1015 = vmatprep.subr.mxu0 0.0
        %1016 = vmatpush1.msra.mxu0 0.0
        %1017 = vmatprep.subr.mxu0 0.0
        %1018 = vmatpush1.msra.mxu0 0.0
        %1019 = vmatprep.subr.mxu0 0.0
        %1020 = vmatpush1.msra.mxu0 0.0
        %1021 = vmatprep.subr.mxu0 0.0
        %1022 = vmatpush1.msra.mxu0 0.0
        %1023 = vmatprep.subr.mxu0 0.0
        %1024 = vmatpush1.msra.mxu0 0.0
        %1025 = vmatprep.subr.mxu0 0.0
        %1026 = vmatpush1.msra.mxu0 0.0
        %1027 = vmatprep.subr.mxu0 0.0
        %1028 = vmatpush1.msra.mxu0 0.0
        %1029 = vmatprep.subr.mxu0 0.0
        %1030 = vmatpush1.msra.mxu0 0.0
        %1031 = vmatprep.subr.mxu0 0.0
        %1032 = vmatpush1.msra.mxu0 0.0
        %1033 = vmatprep.subr.mxu0 0.0
        %1034 = vmatpush1.msra.mxu0 0.0
        %1035 = vmatprep.subr.mxu0 0.0
        %1036 = vmatpush1.msra.mxu0 0.0
        %1037 = vmatprep.subr.mxu0 0.0
        %1038 = vmatpush1.msra.mxu0 0.0
        %1039 = vmatprep.subr.mxu0 0.0
        %1040 = vmatpush1.msra.mxu0 0.0
        %1041 = vmatprep.subr.mxu0 0.0
        %1042 = vmatpush1.msra.mxu0 0.0
        %1043 = vmatprep.subr.mxu0 0.0
        %1044 = vmatpush1.msra.mxu0 0.0
        %1045 = vmatprep.subr.mxu0 0.0
        %1046 = vmatpush1.msra.mxu0 0.0
        %1047 = vmatprep.subr.mxu0 0.0
        %1048 = vmatpush1.msra.mxu0 0.0
        %1049 = vmatprep.subr.mxu0 0.0
        %1050 = vmatpush1.msra.mxu0 0.0
        %1051 = vmatprep.subr.mxu0 0.0
        %1052 = vmatpush1.msra.mxu0 0.0
        %1053 = vmatprep.subr.mxu0 0.0
        %1054 = vmatpush1.msra.mxu0 0.0
        %1055 = vmatprep.subr.mxu0 0.0
        %1056 = vmatpush1.msra.mxu0 0.0
        %1057 = vmatprep.subr.mxu0 0.0
        %1058 = vmatpush1.msra.mxu0 0.0
        %1059 = vmatprep.subr.mxu0 0.0
        %1060 = vmatpush1.msra.mxu0 0.0
        %1061 = vmatprep.subr.mxu0 0.0
        %1062 = vmatpush1.msra.mxu0 0.0
        %1063 = vmatprep.subr.mxu0 0.0
        %1064 = vmatpush1.msra.mxu0 0.0
        %1065 = vmatprep.subr.mxu0 0.0
        %1066 = vmatpush1.msra.mxu0 0.0
        %1067 = vmatprep.subr.mxu0 0.0
        %1068 = vmatpush1.msra.mxu0 0.0
        %1069 = vmatprep.subr.mxu0 0.0
        %1070 = vmatpush1.msra.mxu0 0.0
        %1071 = vmatprep.subr.mxu0 0.0
        %1072 = vmatpush1.msra.mxu0 0.0
        %1073 = vmatprep.subr.mxu0 0.0
        %1074 = vmatpush1.msra.mxu0 0.0
        %1075 = vmatprep.mubr.f32.mxu0 0.0
        %1076 = vmatmul.mubr.f32.gmra.mrb[0].mxu0 %v1009
        %v1077 = vpop.f32.mrb[0].mxu0
        %v1078 = vadd.f32 0.0, %v1077
        %v1079 = vpop.f32.mrb[0].mxu0
        %1080 = vdwg.mxu0
        %1082 = vset.pattern.permute.xlu0 3
        %1083 = vperm.xlu0 %1082, %v991
        %v1084 = vpop.permute.xlu0 %1083
        %vm1086 = vcmask 7168
        %v1087 = vsel %vm1086, %v453, %v629
        %vm1088 = vcmask 15360
        %v1089 = vsel %vm1088, %v1087, %v809
        %vm1090 = vcmask 23552
        %v1091 = vsel %vm1090, %v1089, %v988
        %vm1092 = vcmask 31744
        %1093 = vst.msk [vmem:[#allocation2] sm:$0xff] %vm1092, %v1091
        %v1094 = vsel %vm1086, %v469, %v645
        %v1095 = vsel %vm1088, %v1094, %v825
        %v1096 = vsel %vm1090, %v1095, %v1004
        %1097 = vst.msk [vmem:[#allocation3] sm:$0xff] %vm1092, %v1096
        %v1098 = vsel %vm373, %v546, %v726
        %vm1099 = vcmask 130048
        %v1100 = vsel %vm1099, %v1098, %v905
        %vm1101 = vcmask 195584
        %v1102 = vsel %vm1101, %v1100, %v1084
        %1104 = vrot.lane.b32.xlu0 %v720, 8
        %v1105 = vpop.permute.xlu0 %1104
        %1108 = vrot.lane.b32.xlu0 %v899, 16
        %v1109 = vpop.permute.xlu0 %1108
        %1112 = vrot.lane.b32.xlu0 %v1078, 24
        %v1113 = vpop.permute.xlu0 %1112
        %v1115 = vsel %vm373, %v540, %v1105
        %v1116 = vsel %vm1099, %v1115, %v1109
        %v1117 = vsel %vm1101, %v1116, %v1113
        %v1118 = vld [vmem:[#allocation4] sm:$0xff]
        %v1119 = vmul.f32 %v1102, %v1118
        %v1120 = vadd.f32 %v1119, %v1117
        %vm1121 = vcmask 261120
        %1122 = vst.msk [vmem:[#allocation4] sm:$0xff] %vm1121, %v1120
        %p1123 = scmp.eq.s32.totalorder %s33, 1
        // Predicated region
        $region61: #{tpu_custom_call.1} parent=39 // pred_check
          %p1124 = pneg %p1123
        $region62: #{tpu_custom_call.1} parent=39 // pred_check_branch
          %1126 = sbr.rel (%p1124) target = $region64
        $region63: #{tpu_custom_call.1} parent=39 // pred_region
          %v1127 = vld [vmem:[#allocation3] sm:$0xff]
          %v1128 = vrcp.pop %v1127
          %1130 = vset.pattern.permute.xlu0 0
          %1131 = vperm.xlu0 %1130, %v1128
          %v1132 = vpop.permute.xlu0 %1131
          %1134 = vset.pattern.permute.xlu0 1
          %1135 = vperm.xlu0 %1134, %v1128
          %v1136 = vpop.permute.xlu0 %1135
          %1138 = vset.pattern.permute.xlu0 2
          %1139 = vperm.xlu0 %1138, %v1128
          %v1140 = vpop.permute.xlu0 %1139
          %1142 = vset.pattern.permute.xlu0 3
          %1143 = vperm.xlu0 %1142, %v1128
          %v1144 = vpop.permute.xlu0 %1143
          %v1146 = vsel %vm373, %v1132, %v1136
          %v1147 = vsel %vm1099, %v1146, %v1140
          %v1148 = vsel %vm1101, %v1147, %v1144
          %v1149 = vld [vmem:[#allocation4] sm:$0xff]
          %v1150 = vmul.f32 %v1149, %v1148
          %v1151 = vld [vmem:[#allocation11] sm:$0xff]
          %v1152 = vld [vmem:[#allocation11 + $0x8] sm:$0xff]
          %v1153 = vld [vmem:[#allocation11 + $0x10] sm:$0xff]
          %v1154 = vld [vmem:[#allocation11 + $0x18] sm:$0xff]
          %v1155 = vld [vmem:[%s4] sm:$0x1]
          %v1157 = vlaneseq
          %v1158 = vshrl.u32 %v1157, 7
          %v1159 = vsub.s32 0, %v1158
          %v1160 = vrot.slane %v1155, %v1159
          %v1163 = vsel %vm1121, %v1150, 0
          %1165 = vmatprep.subr.mxu0 0.0
          %1166 = vmatpush1.msra.mxu0 %v1151
          %1167 = vmatprep.subr.mxu0 0.0
          %1168 = vmatpush1.msra.mxu0 %v1152
          %1169 = vmatprep.subr.mxu0 0.0
          %1170 = vmatpush1.msra.mxu0 %v1153
          %1171 = vmatprep.subr.mxu0 0.0
          %1172 = vmatpush1.msra.mxu0 %v1154
          %1173 = vmatprep.subr.mxu0 0.0
          %1174 = vmatpush1.msra.mxu0 0.0
          %1175 = vmatprep.subr.mxu0 0.0
          %1176 = vmatpush1.msra.mxu0 0.0
          %1177 = vmatprep.subr.mxu0 0.0
          %1178 = vmatpush1.msra.mxu0 0.0
          %1179 = vmatprep.subr.mxu0 0.0
          %1180 = vmatpush1.msra.mxu0 0.0
          %1181 = vmatprep.subr.mxu0 0.0
          %1182 = vmatpush1.msra.mxu0 0.0
          %1183 = vmatprep.subr.mxu0 0.0
          %1184 = vmatpush1.msra.mxu0 0.0
          %1185 = vmatprep.subr.mxu0 0.0
          %1186 = vmatpush1.msra.mxu0 0.0
          %1187 = vmatprep.subr.mxu0 0.0
          %1188 = vmatpush1.msra.mxu0 0.0
          %1189 = vmatprep.subr.mxu0 0.0
          %1190 = vmatpush1.msra.mxu0 0.0
          %1191 = vmatprep.subr.mxu0 0.0
          %1192 = vmatpush1.msra.mxu0 0.0
          %1193 = vmatprep.subr.mxu0 0.0
          %1194 = vmatpush1.msra.mxu0 0.0
          %1195 = vmatprep.subr.mxu0 0.0
          %1196 = vmatpush1.msra.mxu0 0.0
          %1197 = vmatprep.subr.mxu0 0.0
          %1198 = vmatpush1.msra.mxu0 0.0
          %1199 = vmatprep.subr.mxu0 0.0
          %1200 = vmatpush1.msra.mxu0 0.0
          %1201 = vmatprep.subr.mxu0 0.0
          %1202 = vmatpush1.msra.mxu0 0.0
          %1203 = vmatprep.subr.mxu0 0.0
          %1204 = vmatpush1.msra.mxu0 0.0
          %1205 = vmatprep.subr.mxu0 0.0
          %1206 = vmatpush1.msra.mxu0 0.0
          %1207 = vmatprep.subr.mxu0 0.0
          %1208 = vmatpush1.msra.mxu0 0.0
          %1209 = vmatprep.subr.mxu0 0.0
          %1210 = vmatpush1.msra.mxu0 0.0
          %1211 = vmatprep.subr.mxu0 0.0
          %1212 = vmatpush1.msra.mxu0 0.0
          %1213 = vmatprep.subr.mxu0 0.0
          %1214 = vmatpush1.msra.mxu0 0.0
          %1215 = vmatprep.subr.mxu0 0.0
          %1216 = vmatpush1.msra.mxu0 0.0
          %1217 = vmatprep.subr.mxu0 0.0
          %1218 = vmatpush1.msra.mxu0 0.0
          %1219 = vmatprep.subr.mxu0 0.0
          %1220 = vmatpush1.msra.mxu0 0.0
          %1221 = vmatprep.subr.mxu0 0.0
          %1222 = vmatpush1.msra.mxu0 0.0
          %1223 = vmatprep.subr.mxu0 0.0
          %1224 = vmatpush1.msra.mxu0 0.0
          %1225 = vmatprep.subr.mxu0 0.0
          %1226 = vmatpush1.msra.mxu0 0.0
          %1227 = vmatprep.subr.mxu0 0.0
          %1228 = vmatpush1.msra.mxu0 0.0
          %1229 = vmatprep.mubr.f32.mxu0 0.0
          %1230 = vmatmul.mubr.f32.gmra.mrb[0].mxu0 %v1163
          %v1231 = vpop.f32.mrb[0].mxu0
          %v1232 = vadd.f32 %v1160, %v1231
          %v1233 = vpop.f32.mrb[0].mxu0
          %1234 = vdwg.mxu0
          %1235 = vst.msk [vmem:[%s358] sm:$0xff] %vm1121, %v1232
        $region64: #{tpu_custom_call.1} parent=39 // pred_fallthru
          _
        %s1236 = sand.u32 %s181, 1
        %s1237 = scalar_lea.sflag [#allocation7], %s1236
        %s1238 = sand.u32 %s181, 1
        %s1239 = smul.addr %s1238, 8
        %s1240 = scalar_lea.vmem [#allocation13], %s1239
        // Predicated region
        $region65: #{tpu_custom_call.1} parent=39 // pred_check
          %p1241 = pneg %p191
        $region66: #{tpu_custom_call.1} parent=39 // pred_check_branch
          %1243 = sbr.rel (%p1241) target = $region68
        $region67: #{tpu_custom_call.1} parent=39 // pred_region
          %s1245 = ssub.s32 128, 128
          %1246 = vsyncadd %s1237, %s1245
          %s1247 = smul.addr %s31, 2
          %s1248 = sadd.s32 %s32, %s1247
          %s1249 = smul.addr %s1248, 128
          %s1250 = scalar_lea.hbm %s5, %s1249
          %s1252 = sshll.u32 %s1240, 4
          %s1253 = int_to_ptr.vmem [resolvable:$true] %s1252
          %1255 = dma.vmem_to_hbm [thread:$0]  %s1253, 128, %s1250, %s1237
        $region68: #{tpu_custom_call.1} parent=39 // pred_fallthru
          _
      $region40: #{tpu_custom_call.1} parent=5 // pred_fallthru
        _
      %p1256 = scmp.le.s32.totalorder 2, %s21
      // Predicated region
      $region69: #{tpu_custom_call.1} parent=5 // pred_check
        %p1257 = pneg %p1256
      $region70: #{tpu_custom_call.1} parent=5 // pred_check_branch
        %1259 = sbr.rel (%p1257) target = $region72
      $region71: #{tpu_custom_call.1} parent=5 // pred_region
        %s1260 = ssub.s32 %s21, 2
        // Predicated region
        $region73: #{tpu_custom_call.1} parent=71 // pred_check
          %p1261 = pneg %p197
        $region74: #{tpu_custom_call.1} parent=71 // pred_check_branch
          %1263 = sbr.rel (%p1261) target = $region76
        $region75: #{tpu_custom_call.1} parent=71 // pred_region
          %s1264 = sand.u32 %s182, 1
          %s1265 = scalar_lea.sflag [#allocation7], %s1264
          %s1266 = sand.u32 %s182, 1
          %s1267 = smul.addr %s1266, 8
          %s1268 = scalar_lea.vmem [#allocation13], %s1267
          %1269 = dma.done %s1265, 128
        $region76: #{tpu_custom_call.1} parent=71 // pred_fallthru
          _
      $region72: #{tpu_custom_call.1} parent=5 // pred_fallthru
        _
    $region6: #{tpu_custom_call.1} parent=1 // loop_footer
      %s25 = sadd.s32 1, %s21
    $region7: #{tpu_custom_call.1} parent=1 // loop_footer_branch
      %20 = sbr.rel target = $region3
    $region8: #{tpu_custom_call.1} parent=1 // loop_exit
      _
    %1270 = vsyncpa [#allocation6], 1
    %s1271 = scalar_lea.sflag [#allocation6], 1
    %1272 = vsyncpa %s1271, 1
    %1273 = vsyncpa [#allocation9], 1
    %s1274 = scalar_lea.sflag [#allocation9], 1
    %1275 = vsyncpa %s1274, 1
    %1276 = vsyncpa [#allocation12], 1
    %1277 = vsyncpa [#allocation7], 1
    %s1278 = scalar_lea.sflag [#allocation7], 1
    %1279 = vsyncpa %s1278, 1

</llo_original>
